<compile_context>
chip_gen: v7x
topology: tpu7x:2x2x1
jax: 0.10.0
libtpu: 0.0.40
codegen_flags: <defaults>
</compile_context>

<pallas_src>
import jax
import jax.numpy as jnp
from jax.experimental import pallas as pl
from jax.experimental.pallas import tpu as pltpu

IGNORE_INDEX = 255
TARGET_PIXELS_PER_STEP = 32768   # ~32K output pixels per grid step


def _round_up(x, m):
    return ((x + m - 1) // m) * m


def _choose_tile_h(B, H, W, target_pixels=TARGET_PIXELS_PER_STEP):
    """Rows of the upsampled image processed per grid step (multiple of 8)."""
    max_tile = _round_up(H, 8)
    desired = _round_up(max(1, (target_pixels + W - 1) // W), 8)
    tile_h = min(max_tile, desired)
    # v7x has two TensorCores that shard "parallel" grid axes: keep >= 2 steps.
    while B * (_round_up(H, tile_h) // tile_h) < 2 and tile_h > 8:
        tile_h = max(8, _round_up(tile_h // 2, 8))
    return tile_h


def _interp_matrix(out_size, in_size):
    """Rows of linear-interp weights so (A @ v) == align_corners=True resize."""
    if in_size == 1:
        return jnp.ones((out_size, 1), jnp.float32)
    pos = jnp.linspace(0.0, in_size - 1.0, out_size)
    lo = jnp.clip(jnp.floor(pos).astype(jnp.int32), 0, in_size - 2)
    hi = lo + 1
    w = (pos - lo.astype(jnp.float32)).astype(jnp.float32)
    cols = jnp.arange(in_size, dtype=jnp.int32)
    a_lo = (cols[None, :] == lo[:, None]).astype(jnp.float32) * (1.0 - w)[:, None]
    a_hi = (cols[None, :] == hi[:, None]).astype(jnp.float32) * w[:, None]
    return a_lo + a_hi                                          # (out_size, in_size)


# ----------------------------------------------------------------------------
# Pallas kernel: fused bilinear resize + softmax -> per-class Lovasz errors + CE
# ----------------------------------------------------------------------------
def _fused_resize_softmax_kernel(preds_ref, ay_ref, axt_ref, labels_ref,
                                 err_ref, ce_ref):
    # preds_ref : (1, C, h, w) f32   low-res logits for the current batch image
    # ay_ref    : (tile_h, h)  f32   interp rows for this row block
    # axt_ref   : (w, W)       f32   interp columns (transposed), resident
    # labels_ref: (1, tile_h, W) i32
    # err_ref   : (C, 1, tile_h, W) f32   per-class Lovasz errors (invalid -> -1)
    # ce_ref    : (1, tile_h, W)    f32   per-pixel CE (invalid -> 0)
    C = preds_ref.shape[1]

    preds_b = preds_ref[0]                                   # (C, h, w)
    a_y = ay_ref[...]                                        # (tile_h, h)
    a_xt = axt_ref[...]                                      # (w, W)
    lbl = labels_ref[0]                                      # (tile_h, W)
    valid = lbl != IGNORE_INDEX

    # Fused bilinear upsample: two small MXU matmuls per class, no HBM logits.
    logits = []
    for c in range(C):
        ty = jnp.dot(a_y, preds_b[c], preferred_element_type=jnp.float32)   # (tile_h, w)
        logits.append(jnp.dot(ty, a_xt, preferred_element_type=jnp.float32))  # (tile_h, W)

    # Softmax over classes as pure elementwise VPU ops across the per-class planes.
    m = logits[0]
    for c in range(1, C):
        m = jnp.maximum(m, logits[c])
    exps = [jnp.exp(l - m) for l in logits]
    s = exps[0]
    for c in range(1, C):
        s = s + exps[c]
    inv_s = 1.0 / s            # exact divide: keeps softmax numerics reference-exact
    log_s = jnp.log(s)

    x_lbl = jnp.zeros_like(m)
    for c in range(C):
        is_c = lbl == c
        fg_c = is_c.astype(jnp.float32)
        # Lovasz error |fg - p_c|; invalid / padded pixels pinned to -1 so a
        # descending sort pushes them past every valid pixel.
        err_c = jnp.where(valid, jnp.abs(fg_c - exps[c] * inv_s), -1.0)
        err_ref[c, 0] = err_c                                # direct lane-dense store
        x_lbl = x_lbl + jnp.where(is_c, logits[c], 0.0)

    # CE = -(log-softmax at label) = log(s) + m - x[label]; 0 for ignored pixels.
    ce_ref[0] = jnp.where(valid, (log_s + m) - x_lbl, 0.0)


def fused_parsing_head_pallas(preds, labels):
    """preds: (B, C, h, w) logits; labels: (B, H, W) int labels (255 = ignore).

    Returns (errors (C, P) f32, ce (P,) f32, labels_padded (P,) int32),
    where P = B * H_pad * W and pad pixels carry label 255.
    """
    B, C, h, w = preds.shape
    H, W = labels.shape[1], labels.shape[2]
    assert C < IGNORE_INDEX, "ignore_index must not collide with a class id"

    tile_h = _choose_tile_h(B, H, W)
    H_pad = _round_up(H, tile_h)
    R = H_pad // tile_h

    a_y = _interp_matrix(H, h)                               # (H, h)
    if H_pad > H:
        a_y = jnp.pad(a_y, ((0, H_pad - H), (0, 0)))         # zero rows for pad
    a_xt = _interp_matrix(W, w).T                            # (w, W)

    labels = labels.astype(jnp.int32)
    if H_pad > H:
        labels = jnp.pad(labels, ((0, 0), (0, H_pad - H), (0, 0)),
                         constant_values=IGNORE_INDEX)

    # VMEM budget: double-buffered blocks + headroom for per-class temporaries.
    block_bytes = 4 * (C * h * w + tile_h * h + w * W
                       + tile_h * W + C * tile_h * W + tile_h * W)
    vmem_limit = int(min(6 * block_bytes + (16 << 20), 48 << 20))

    errors, ce = pl.pallas_call(
        _fused_resize_softmax_kernel,
        out_shape=(jax.ShapeDtypeStruct((C, B, H_pad, W), jnp.float32),
                   jax.ShapeDtypeStruct((B, H_pad, W), jnp.float32)),
        grid_spec=pltpu.PrefetchScalarGridSpec(
            num_scalar_prefetch=0,
            grid=(B, R),
            in_specs=[
                pl.BlockSpec((1, C, h, w), lambda b, r: (b, 0, 0, 0)),  # low-res preds
                pl.BlockSpec((tile_h, h), lambda b, r: (r, 0)),         # A_y row tile
                pl.BlockSpec((w, W), lambda b, r: (0, 0)),              # A_x^T (resident)
                pl.BlockSpec((1, tile_h, W), lambda b, r: (b, r, 0)),   # labels tile
            ],
            out_specs=[
                pl.BlockSpec((C, 1, tile_h, W), lambda b, r: (0, b, r, 0)),
                pl.BlockSpec((1, tile_h, W), lambda b, r: (b, r, 0)),
            ],
        ),
        compiler_params=pltpu.CompilerParams(
            dimension_semantics=("parallel", "parallel"),
            vmem_limit_bytes=vmem_limit),
    )(preds.astype(jnp.float32), a_y, a_xt, labels)

    P = B * H_pad * W
    return errors.reshape(C, P), ce.reshape(P), labels.reshape(P)


# ----------------------------------------------------------------------------
# XLA epilogue: batched Lovasz finalization (sort + single scan)
# ----------------------------------------------------------------------------
def lovasz_from_errors(errors_cp, labels_p):
    """Lovasz-Softmax (classes='present', ignore=255) from in-kernel errors.

    errors_cp: (C, P) with invalid/pad pixels already set to -1.0;
    labels_p : (P,) int32 (pad pixels = 255).
    """
    C, P = errors_cp.shape
    valid = labels_p != IGNORE_INDEX
    classes = jnp.arange(C, dtype=jnp.int32)[:, None]                    # (C, 1)
    fg = ((labels_p[None, :] == classes) & valid[None, :]).astype(jnp.float32)  # (C, P)

    # One batched descending sort; unstable is fine (tied errors contribute
    # identically to the loss regardless of tie order).
    neg_err_sorted, fg_sorted = jax.lax.sort(
        (-errors_cp, fg), dimension=-1, is_stable=False, num_keys=1)
    errors_sorted = -neg_err_sorted
    keep = errors_sorted >= 0.0                                          # valid pixels only

    gts = jnp.sum(fg, axis=-1, keepdims=True)                            # (C, 1)
    csum_fg = jnp.cumsum(fg_sorted, axis=-1)                             # single scan
    pos = jnp.arange(1, P + 1, dtype=jnp.float32)[None, :]               # (1, P)
    intersection = gts - csum_fg
    union = gts + pos - csum_fg            # == gts + cumsum(1 - fg_sorted), never 0
    jaccard = 1.0 - intersection / union
    grad = jnp.concatenate([jaccard[:, :1], jaccard[:, 1:] - jaccard[:, :-1]], axis=-1)

    losses = jnp.sum(jnp.where(keep, errors_sorted, 0.0) * grad, axis=-1)  # (C,)
    present = (gts[:, 0] > 0).astype(jnp.float32)
    # NOTE: if no class is present (everything ignored) this returns 0, whereas
    # PyTorch's mean over an empty class list would be NaN (intentional).
    return jnp.sum(losses * present) / jnp.maximum(jnp.sum(present), 1.0)


def parsing_loss(parsing_logits, label_parsing):
    """0.5 * Lovasz + 0.5 * CrossEntropy(ignore=255) with fused bilinear upsample."""
    errors, ce, labels_pad = fused_parsing_head_pallas(parsing_logits, label_parsing)
    n_valid = jnp.sum((labels_pad != IGNORE_INDEX).astype(jnp.float32))
    ce_mean = jnp.sum(ce) / jnp.maximum(n_valid, 1.0)
    lovasz = lovasz_from_errors(errors, labels_pad)
    return 0.5 * lovasz + 0.5 * ce_mean


def criterion_par_forward(preds, target, lamda):
    """Criterion_par.forward. preds: (B,C,h,w) array or list thereof;
    target: (B,H,W) int labels; lamda: (out_len,) parameter."""
    if isinstance(preds, (list, tuple)):
        loss = 0.0
        for i, p in enumerate(preds):
            loss = loss + parsing_loss(p, target) * jnp.exp(-lamda[i]) + lamda[i]
        return loss
    # tensor branch of the PyTorch module uses the full lamda vector
    return parsing_loss(preds, target) * jnp.exp(-lamda) + lamda


# ----------------------------------------------------------------------------
if __name__ == "__main__":
    key = jax.random.PRNGKey(0)
    k1, k2 = jax.random.split(key)

    B, C = 2, 4          # num parsing classes = 4
    h_pred, w_pred = 8, 8
    H, W = 16, 16        # label resolution (interpolation target)
    out_len = 1

    preds = jax.random.normal(k1, (B, C, h_pred, w_pred), dtype=jnp.float32)
    raw = jax.random.randint(k2, (B, H, W), 0, C + 1)
    target = jnp.where(raw == C, IGNORE_INDEX, raw).astype(jnp.int32)

    # deterministic parameter init, matching nn.Parameter(2.3 * torch.ones(out_len))
    lamda = 2.3 * jnp.ones((out_len,), dtype=jnp.float32)

    fwd = jax.jit(criterion_par_forward)
    loss = fwd(preds, target, lamda)
    jax.block_until_ready(loss)

    assert loss.shape == (out_len,)
    assert bool(jnp.all(jnp.isfinite(loss)))
    print("KERNEL_OK")
</pallas_src>

<mosaic_0001>
module attributes {stable_mosaic.version = 11 : i64} {
  func.func @_fused_resize_softmax_kernel(%arg0: i32, %arg1: i32, %arg2: memref<1x4x8x8xf32, #tpu.memory_space<vmem>>, %arg3: memref<16x8xf32, #tpu.memory_space<vmem>>, %arg4: memref<8x16xf32, #tpu.memory_space<vmem>>, %arg5: memref<1x16x16xi32, #tpu.memory_space<vmem>>, %arg6: memref<4x1x16x16xf32, #tpu.memory_space<vmem>>, %arg7: memref<1x16x16xf32, #tpu.memory_space<vmem>>) attributes {dimension_semantics = [#tpu.dimension_semantics<parallel>, #tpu.dimension_semantics<parallel>], iteration_bounds = array<i64: 2, 1>, scalar_prefetch = 0 : i64, scratch_operands = 0 : i64, tpu.core_type = #tpu.core_type<tc>, window_params = [{transform_indices = @transform_0, window_bounds = array<i64: 1, 4, 8, 8>}, {transform_indices = @transform_1, window_bounds = array<i64: 16, 8>}, {pipeline_mode = #tpu.pipeline_mode<synchronous>, transform_indices = @transform_2, window_bounds = array<i64: 8, 16>}, {transform_indices = @transform_3, window_bounds = array<i64: 1, 16, 16>}, {transform_indices = @transform_4, window_bounds = array<i64: 4, 1, 16, 16>}, {transform_indices = @transform_5, window_bounds = array<i64: 1, 16, 16>}]} {
    %c0 = arith.constant 0 : index
    %c0_0 = arith.constant 0 : index
    %c0_1 = arith.constant 0 : index
    %c0_2 = arith.constant 0 : index
    %0 = vector.load %arg2[%c0, %c0_0, %c0_1, %c0_2] : memref<1x4x8x8xf32, #tpu.memory_space<vmem>>, vector<1x4x8x8xf32>
    %1 = vector.shape_cast %0 : vector<1x4x8x8xf32> to vector<4x8x8xf32>
    %c0_3 = arith.constant 0 : index
    %c0_4 = arith.constant 0 : index
    %2 = vector.load %arg3[%c0_3, %c0_4] : memref<16x8xf32, #tpu.memory_space<vmem>>, vector<16x8xf32>
    %c0_5 = arith.constant 0 : index
    %c0_6 = arith.constant 0 : index
    %3 = vector.load %arg4[%c0_5, %c0_6] : memref<8x16xf32, #tpu.memory_space<vmem>>, vector<8x16xf32>
    %c0_7 = arith.constant 0 : index
    %c0_8 = arith.constant 0 : index
    %c0_9 = arith.constant 0 : index
    %4 = vector.load %arg5[%c0_7, %c0_8, %c0_9] : memref<1x16x16xi32, #tpu.memory_space<vmem>>, vector<1x16x16xi32>
    %5 = vector.shape_cast %4 : vector<1x16x16xi32> to vector<16x16xi32>
    %c255_i32 = arith.constant 255 : i32
    %6 = vector.broadcast %c255_i32 : i32 to vector<16x16xi32>
    %7 = arith.cmpi ne, %5, %6 : vector<16x16xi32>
    %8 = vector.extract_strided_slice %1 {offsets = [0, 0, 0], sizes = [1, 8, 8], strides = [1, 1, 1]} : vector<4x8x8xf32> to vector<1x8x8xf32>
    %9 = vector.shape_cast %8 : vector<1x8x8xf32> to vector<8x8xf32>
    %cst = arith.constant dense<0.000000e+00> : vector<16x8xf32>
    %10 = tpu.matmul %2, %9, %cst {dimension_numbers = #tpu.dot_dimension_numbers<[1], [0], [0], [1], [0, 0, 1, 1], [], []>} : vector<16x8xf32>, vector<8x8xf32>, vector<16x8xf32> -> vector<16x8xf32>
    %cst_10 = arith.constant dense<0.000000e+00> : vector<16x16xf32>
    %11 = tpu.matmul %10, %3, %cst_10 {dimension_numbers = #tpu.dot_dimension_numbers<[1], [0], [0], [1], [0, 0, 1, 1], [], []>} : vector<16x8xf32>, vector<8x16xf32>, vector<16x16xf32> -> vector<16x16xf32>
    %12 = vector.extract_strided_slice %1 {offsets = [1, 0, 0], sizes = [1, 8, 8], strides = [1, 1, 1]} : vector<4x8x8xf32> to vector<1x8x8xf32>
    %13 = vector.shape_cast %12 : vector<1x8x8xf32> to vector<8x8xf32>
    %cst_11 = arith.constant dense<0.000000e+00> : vector<16x8xf32>
    %14 = tpu.matmul %2, %13, %cst_11 {dimension_numbers = #tpu.dot_dimension_numbers<[1], [0], [0], [1], [0, 0, 1, 1], [], []>} : vector<16x8xf32>, vector<8x8xf32>, vector<16x8xf32> -> vector<16x8xf32>
    %cst_12 = arith.constant dense<0.000000e+00> : vector<16x16xf32>
    %15 = tpu.matmul %14, %3, %cst_12 {dimension_numbers = #tpu.dot_dimension_numbers<[1], [0], [0], [1], [0, 0, 1, 1], [], []>} : vector<16x8xf32>, vector<8x16xf32>, vector<16x16xf32> -> vector<16x16xf32>
    %16 = vector.extract_strided_slice %1 {offsets = [2, 0, 0], sizes = [1, 8, 8], strides = [1, 1, 1]} : vector<4x8x8xf32> to vector<1x8x8xf32>
    %17 = vector.shape_cast %16 : vector<1x8x8xf32> to vector<8x8xf32>
    %cst_13 = arith.constant dense<0.000000e+00> : vector<16x8xf32>
    %18 = tpu.matmul %2, %17, %cst_13 {dimension_numbers = #tpu.dot_dimension_numbers<[1], [0], [0], [1], [0, 0, 1, 1], [], []>} : vector<16x8xf32>, vector<8x8xf32>, vector<16x8xf32> -> vector<16x8xf32>
    %cst_14 = arith.constant dense<0.000000e+00> : vector<16x16xf32>
    %19 = tpu.matmul %18, %3, %cst_14 {dimension_numbers = #tpu.dot_dimension_numbers<[1], [0], [0], [1], [0, 0, 1, 1], [], []>} : vector<16x8xf32>, vector<8x16xf32>, vector<16x16xf32> -> vector<16x16xf32>
    %20 = vector.extract_strided_slice %1 {offsets = [3, 0, 0], sizes = [1, 8, 8], strides = [1, 1, 1]} : vector<4x8x8xf32> to vector<1x8x8xf32>
    %21 = vector.shape_cast %20 : vector<1x8x8xf32> to vector<8x8xf32>
    %cst_15 = arith.constant dense<0.000000e+00> : vector<16x8xf32>
    %22 = tpu.matmul %2, %21, %cst_15 {dimension_numbers = #tpu.dot_dimension_numbers<[1], [0], [0], [1], [0, 0, 1, 1], [], []>} : vector<16x8xf32>, vector<8x8xf32>, vector<16x8xf32> -> vector<16x8xf32>
    %cst_16 = arith.constant dense<0.000000e+00> : vector<16x16xf32>
    %23 = tpu.matmul %22, %3, %cst_16 {dimension_numbers = #tpu.dot_dimension_numbers<[1], [0], [0], [1], [0, 0, 1, 1], [], []>} : vector<16x8xf32>, vector<8x16xf32>, vector<16x16xf32> -> vector<16x16xf32>
    %24 = arith.maximumf %11, %15 : vector<16x16xf32>
    %25 = arith.maximumf %24, %19 : vector<16x16xf32>
    %26 = arith.maximumf %25, %23 : vector<16x16xf32>
    %27 = arith.subf %11, %26 : vector<16x16xf32>
    %28 = math.exp %27 : vector<16x16xf32>
    %29 = arith.subf %15, %26 : vector<16x16xf32>
    %30 = math.exp %29 : vector<16x16xf32>
    %31 = arith.subf %19, %26 : vector<16x16xf32>
    %32 = math.exp %31 : vector<16x16xf32>
    %33 = arith.subf %23, %26 : vector<16x16xf32>
    %34 = math.exp %33 : vector<16x16xf32>
    %35 = arith.addf %28, %30 : vector<16x16xf32>
    %36 = arith.addf %35, %32 : vector<16x16xf32>
    %37 = arith.addf %36, %34 : vector<16x16xf32>
    %cst_17 = arith.constant 1.000000e+00 : f32
    %38 = vector.broadcast %cst_17 : f32 to vector<16x16xf32>
    %39 = arith.divf %38, %37 : vector<16x16xf32>
    %40 = math.log %37 : vector<16x16xf32>
    %cst_18 = arith.constant 0.000000e+00 : f32
    %41 = vector.broadcast %cst_18 : f32 to vector<16x16xf32>
    %c0_i32 = arith.constant 0 : i32
    %42 = vector.broadcast %c0_i32 : i32 to vector<16x16xi32>
    %43 = arith.cmpi eq, %5, %42 : vector<16x16xi32>
    %44 = arith.extui %43 : vector<16x16xi1> to vector<16x16xi32>
    %45 = arith.sitofp %44 : vector<16x16xi32> to vector<16x16xf32>
    %46 = arith.mulf %28, %39 : vector<16x16xf32>
    %47 = arith.subf %45, %46 : vector<16x16xf32>
    %48 = math.absf %47 : vector<16x16xf32>
    %cst_19 = arith.constant -1.000000e+00 : f32
    %49 = vector.broadcast %cst_19 : f32 to vector<16x16xf32>
    %50 = arith.select %7, %48, %49 : vector<16x16xi1>, vector<16x16xf32>
    %c0_20 = arith.constant 0 : index
    %c0_21 = arith.constant 0 : index
    %c0_22 = arith.constant 0 : index
    %c0_23 = arith.constant 0 : index
    %51 = vector.load %arg6[%c0_20, %c0_21, %c0_22, %c0_23] : memref<4x1x16x16xf32, #tpu.memory_space<vmem>>, vector<1x1x16x16xf32>
    %52 = vector.shape_cast %51 : vector<1x1x16x16xf32> to vector<16x16xf32>
    %53 = vector.shape_cast %50 : vector<16x16xf32> to vector<1x1x16x16xf32>
    tpu.vector_store %arg6[%c0_20, %c0_21, %c0_22, %c0_23], %53 {strides = array<i32>} : memref<4x1x16x16xf32, #tpu.memory_space<vmem>>, vector<1x1x16x16xf32>,
    %cst_24 = arith.constant 0.000000e+00 : f32
    %54 = vector.broadcast %cst_24 : f32 to vector<16x16xf32>
    %55 = arith.select %43, %11, %54 : vector<16x16xi1>, vector<16x16xf32>
    %56 = arith.addf %41, %55 : vector<16x16xf32>
    %c1_i32 = arith.constant 1 : i32
    %57 = vector.broadcast %c1_i32 : i32 to vector<16x16xi32>
    %58 = arith.cmpi eq, %5, %57 : vector<16x16xi32>
    %59 = arith.extui %58 : vector<16x16xi1> to vector<16x16xi32>
    %60 = arith.sitofp %59 : vector<16x16xi32> to vector<16x16xf32>
    %61 = arith.mulf %30, %39 : vector<16x16xf32>
    %62 = arith.subf %60, %61 : vector<16x16xf32>
    %63 = math.absf %62 : vector<16x16xf32>
    %cst_25 = arith.constant -1.000000e+00 : f32
    %64 = vector.broadcast %cst_25 : f32 to vector<16x16xf32>
    %65 = arith.select %7, %63, %64 : vector<16x16xi1>, vector<16x16xf32>
    %c1 = arith.constant 1 : index
    %c0_26 = arith.constant 0 : index
    %c0_27 = arith.constant 0 : index
    %c0_28 = arith.constant 0 : index
    %66 = vector.load %arg6[%c1, %c0_26, %c0_27, %c0_28] : memref<4x1x16x16xf32, #tpu.memory_space<vmem>>, vector<1x1x16x16xf32>
    %67 = vector.shape_cast %66 : vector<1x1x16x16xf32> to vector<16x16xf32>
    %68 = vector.shape_cast %65 : vector<16x16xf32> to vector<1x1x16x16xf32>
    tpu.vector_store %arg6[%c1, %c0_26, %c0_27, %c0_28], %68 {strides = array<i32>} : memref<4x1x16x16xf32, #tpu.memory_space<vmem>>, vector<1x1x16x16xf32>,
    %cst_29 = arith.constant 0.000000e+00 : f32
    %69 = vector.broadcast %cst_29 : f32 to vector<16x16xf32>
    %70 = arith.select %58, %15, %69 : vector<16x16xi1>, vector<16x16xf32>
    %71 = arith.addf %56, %70 : vector<16x16xf32>
    %c2_i32 = arith.constant 2 : i32
    %72 = vector.broadcast %c2_i32 : i32 to vector<16x16xi32>
    %73 = arith.cmpi eq, %5, %72 : vector<16x16xi32>
    %74 = arith.extui %73 : vector<16x16xi1> to vector<16x16xi32>
    %75 = arith.sitofp %74 : vector<16x16xi32> to vector<16x16xf32>
    %76 = arith.mulf %32, %39 : vector<16x16xf32>
    %77 = arith.subf %75, %76 : vector<16x16xf32>
    %78 = math.absf %77 : vector<16x16xf32>
    %cst_30 = arith.constant -1.000000e+00 : f32
    %79 = vector.broadcast %cst_30 : f32 to vector<16x16xf32>
    %80 = arith.select %7, %78, %79 : vector<16x16xi1>, vector<16x16xf32>
    %c2 = arith.constant 2 : index
    %c0_31 = arith.constant 0 : index
    %c0_32 = arith.constant 0 : index
    %c0_33 = arith.constant 0 : index
    %81 = vector.load %arg6[%c2, %c0_31, %c0_32, %c0_33] : memref<4x1x16x16xf32, #tpu.memory_space<vmem>>, vector<1x1x16x16xf32>
    %82 = vector.shape_cast %81 : vector<1x1x16x16xf32> to vector<16x16xf32>
    %83 = vector.shape_cast %80 : vector<16x16xf32> to vector<1x1x16x16xf32>
    tpu.vector_store %arg6[%c2, %c0_31, %c0_32, %c0_33], %83 {strides = array<i32>} : memref<4x1x16x16xf32, #tpu.memory_space<vmem>>, vector<1x1x16x16xf32>,
    %cst_34 = arith.constant 0.000000e+00 : f32
    %84 = vector.broadcast %cst_34 : f32 to vector<16x16xf32>
    %85 = arith.select %73, %19, %84 : vector<16x16xi1>, vector<16x16xf32>
    %86 = arith.addf %71, %85 : vector<16x16xf32>
    %c3_i32 = arith.constant 3 : i32
    %87 = vector.broadcast %c3_i32 : i32 to vector<16x16xi32>
    %88 = arith.cmpi eq, %5, %87 : vector<16x16xi32>
    %89 = arith.extui %88 : vector<16x16xi1> to vector<16x16xi32>
    %90 = arith.sitofp %89 : vector<16x16xi32> to vector<16x16xf32>
    %91 = arith.mulf %34, %39 : vector<16x16xf32>
    %92 = arith.subf %90, %91 : vector<16x16xf32>
    %93 = math.absf %92 : vector<16x16xf32>
    %cst_35 = arith.constant -1.000000e+00 : f32
    %94 = vector.broadcast %cst_35 : f32 to vector<16x16xf32>
    %95 = arith.select %7, %93, %94 : vector<16x16xi1>, vector<16x16xf32>
    %c3 = arith.constant 3 : index
    %c0_36 = arith.constant 0 : index
    %c0_37 = arith.constant 0 : index
    %c0_38 = arith.constant 0 : index
    %96 = vector.load %arg6[%c3, %c0_36, %c0_37, %c0_38] : memref<4x1x16x16xf32, #tpu.memory_space<vmem>>, vector<1x1x16x16xf32>
    %97 = vector.shape_cast %96 : vector<1x1x16x16xf32> to vector<16x16xf32>
    %98 = vector.shape_cast %95 : vector<16x16xf32> to vector<1x1x16x16xf32>
    tpu.vector_store %arg6[%c3, %c0_36, %c0_37, %c0_38], %98 {strides = array<i32>} : memref<4x1x16x16xf32, #tpu.memory_space<vmem>>, vector<1x1x16x16xf32>,
    %cst_39 = arith.constant 0.000000e+00 : f32
    %99 = vector.broadcast %cst_39 : f32 to vector<16x16xf32>
    %100 = arith.select %88, %23, %99 : vector<16x16xi1>, vector<16x16xf32>
    %101 = arith.addf %86, %100 : vector<16x16xf32>
    %102 = arith.addf %40, %26 : vector<16x16xf32>
    %103 = arith.subf %102, %101 : vector<16x16xf32>
    %cst_40 = arith.constant 0.000000e+00 : f32
    %104 = vector.broadcast %cst_40 : f32 to vector<16x16xf32>
    %105 = arith.select %7, %103, %104 : vector<16x16xi1>, vector<16x16xf32>
    %c0_41 = arith.constant 0 : index
    %c0_42 = arith.constant 0 : index
    %c0_43 = arith.constant 0 : index
    %106 = vector.load %arg7[%c0_41, %c0_42, %c0_43] : memref<1x16x16xf32, #tpu.memory_space<vmem>>, vector<1x16x16xf32>
    %107 = vector.shape_cast %106 : vector<1x16x16xf32> to vector<16x16xf32>
    %108 = vector.shape_cast %105 : vector<16x16xf32> to vector<1x16x16xf32>
    tpu.vector_store %arg7[%c0_41, %c0_42, %c0_43], %108 {strides = array<i32>} : memref<1x16x16xf32, #tpu.memory_space<vmem>>, vector<1x16x16xf32>,
    return
  }
  func.func @transform_0(%arg0: i32, %arg1: i32) -> (i32, i32, i32, i32) {
    %c0_i32 = arith.constant 0 : i32
    %c0_i32_0 = arith.constant 0 : i32
    %c0_i32_1 = arith.constant 0 : i32
    %c0_i32_2 = arith.constant 0 : i32
    return %arg0, %c0_i32, %c0_i32_0, %c0_i32_1 : i32, i32, i32, i32
  }
  func.func @transform_1(%arg0: i32, %arg1: i32) -> (i32, i32) {
    %c0_i32 = arith.constant 0 : i32
    %c0_i32_0 = arith.constant 0 : i32
    return %arg1, %c0_i32 : i32, i32
  }
  func.func @transform_2(%arg0: i32, %arg1: i32) -> (i32, i32) {
    %c0_i32 = arith.constant 0 : i32
    %c0_i32_0 = arith.constant 0 : i32
    %c0_i32_1 = arith.constant 0 : i32
    return %c0_i32, %c0_i32_0 : i32, i32
  }
  func.func @transform_3(%arg0: i32, %arg1: i32) -> (i32, i32, i32) {
    %c0_i32 = arith.constant 0 : i32
    %c0_i32_0 = arith.constant 0 : i32
    return %arg0, %arg1, %c0_i32 : i32, i32, i32
  }
  func.func @transform_4(%arg0: i32, %arg1: i32) -> (i32, i32, i32, i32) {
    %c0_i32 = arith.constant 0 : i32
    %c0_i32_0 = arith.constant 0 : i32
    %c0_i32_1 = arith.constant 0 : i32
    return %c0_i32, %arg0, %arg1, %c0_i32_0 : i32, i32, i32, i32
  }
  func.func @transform_5(%arg0: i32, %arg1: i32) -> (i32, i32, i32) {
    %c0_i32 = arith.constant 0 : i32
    %c0_i32_0 = arith.constant 0 : i32
    return %arg0, %arg1, %c0_i32 : i32, i32, i32
  }
}

</mosaic_0001>

<llo_original>
// kernel: eq.68
$region0: #{eq.68}
  %s0 = inlined_call_operand.vmem [shape: s32[2,16,16], index: 0, kind: input, shape index: {}]
  %s1 = inlined_call_operand.vmem [shape: s32[512], index: 1, kind: output, shape index: {}]
  $region1: #{eq.68} parent=0
    #allocation0 [shape = 'u8[4096]{0}', space=vmem, size = 0x1000, scoped, tag = 'scoped mem for output reshape']
    %v2 = vld [vmem:[%s0] ss:$8 sm:$0xf]
    %vm3 = vcmask 130048
    %4 = vst.msk [vmem:[#allocation0] sm:$0xf] %vm3, %v2
    %s5 = scalar_lea.vmem %s0, 7
    %v6 = vld [vmem:[%s5] ss:$8 sm:$0xf]
    %7 = vrot.lane.b32.xlu0 %v6, 112
    %v8 = vpop.permute.xlu0 %7
    %vm9 = vcmask 1048448
    %10 = vst.msk [vmem:[#allocation0] sm:$0xf] %vm9, %v8
    %s11 = scalar_lea.vmem %s0, 6
    %v12 = vld [vmem:[%s11] ss:$8 sm:$0xf]
    %13 = vrot.lane.b32.xlu0 %v12, 96
    %v14 = vpop.permute.xlu0 %13
    %vm15 = vcmask 917248
    %16 = vst.msk [vmem:[#allocation0] sm:$0xf] %vm15, %v14
    %s17 = scalar_lea.vmem %s0, 5
    %v18 = vld [vmem:[%s17] ss:$8 sm:$0xf]
    %19 = vrot.lane.b32.xlu0 %v18, 80
    %v20 = vpop.permute.xlu0 %19
    %vm21 = vcmask 786048
    %22 = vst.msk [vmem:[#allocation0] sm:$0xf] %vm21, %v20
    %s23 = scalar_lea.vmem %s0, 4
    %v24 = vld [vmem:[%s23] ss:$8 sm:$0xf]
    %25 = vrot.lane.b32.xlu0 %v24, 64
    %v26 = vpop.permute.xlu0 %25
    %vm27 = vcmask 654848
    %28 = vst.msk [vmem:[#allocation0] sm:$0xf] %vm27, %v26
    %s29 = scalar_lea.vmem %s0, 3
    %v30 = vld [vmem:[%s29] ss:$8 sm:$0xf]
    %31 = vrot.lane.b32.xlu0 %v30, 48
    %v32 = vpop.permute.xlu0 %31
    %vm33 = vcmask 523648
    %34 = vst.msk [vmem:[#allocation0] sm:$0xf] %vm33, %v32
    %s35 = scalar_lea.vmem %s0, 2
    %v36 = vld [vmem:[%s35] ss:$8 sm:$0xf]
    %37 = vrot.lane.b32.xlu0 %v36, 32
    %v38 = vpop.permute.xlu0 %37
    %vm39 = vcmask 392448
    %40 = vst.msk [vmem:[#allocation0] sm:$0xf] %vm39, %v38
    %s41 = scalar_lea.vmem %s0, 1
    %v42 = vld [vmem:[%s41] ss:$8 sm:$0xf]
    %43 = vrot.lane.b32.xlu0 %v42, 16
    %v44 = vpop.permute.xlu0 %43
    %vm45 = vcmask 261248
    %46 = vst.msk [vmem:[#allocation0] sm:$0xf] %vm45, %v44
    %s48 = sshllo.u32 0, 4
    %v50 = vld [vmem:[#allocation0] sm:%s48]
    %s51 = sshllo.u32 0, 4
    %52 = vst [vmem:[%s1] sm:%s51] %v50

// kernel: neg.0
$region0: #{neg.0}
  #allocation0 [shape = 's32[1]{0}', space=sflag, size = 0x4, scoped, tag = 'scoped memory for neg.0']
  %s0 = inlined_call_operand.vmem [shape: f32[4,2,16,16], index: 0, kind: input, shape index: {}]
  %s1 = inlined_call_operand.vmem [shape: f32[4,2,16,16], index: 1, kind: output, shape index: {}]
  %v2 = vld [vmem:[%s0] sm:$0xff]
  %3 = xla_tuple %v2
  %4 = xla_tuple %3
  %v5 = vxor.u32 %v2, 2147483648
  %6 = xla_tuple %v5
  %7 = vst [vmem:[%s1] sm:$0xff] %v5
  %s8 = scalar_lea.vmem %s0, 32
  %v9 = vld [vmem:[%s8] sm:$0xff]
  %10 = xla_tuple %v9
  %11 = xla_tuple %10
  %v12 = vxor.u32 %v9, 2147483648
  %13 = xla_tuple %v12
  %s14 = scalar_lea.vmem %s1, 32
  %15 = vst [vmem:[%s14] sm:$0xff] %v12
  %s16 = scalar_lea.vmem %s0, 64
  %v17 = vld [vmem:[%s16] sm:$0xff]
  %18 = xla_tuple %v17
  %19 = xla_tuple %18
  %v20 = vxor.u32 %v17, 2147483648
  %21 = xla_tuple %v20
  %s22 = scalar_lea.vmem %s1, 64
  %23 = vst [vmem:[%s22] sm:$0xff] %v20
  %s24 = scalar_lea.vmem %s0, 96
  %v25 = vld [vmem:[%s24] sm:$0xff]
  %26 = xla_tuple %v25
  %27 = xla_tuple %26
  %v28 = vxor.u32 %v25, 2147483648
  %29 = xla_tuple %v28
  %s30 = scalar_lea.vmem %s1, 96
  %31 = vst [vmem:[%s30] sm:$0xff] %v28
  %s32 = scalar_lea.vmem %s0, 16
  %v33 = vld [vmem:[%s32] sm:$0xff]
  %34 = xla_tuple %v33
  %35 = xla_tuple %34
  %v36 = vxor.u32 %v33, 2147483648
  %37 = xla_tuple %v36
  %s38 = scalar_lea.vmem %s1, 16
  %39 = vst [vmem:[%s38] sm:$0xff] %v36
  %s40 = scalar_lea.vmem %s0, 48
  %v41 = vld [vmem:[%s40] sm:$0xff]
  %42 = xla_tuple %v41
  %43 = xla_tuple %42
  %v44 = vxor.u32 %v41, 2147483648
  %45 = xla_tuple %v44
  %s46 = scalar_lea.vmem %s1, 48
  %47 = vst [vmem:[%s46] sm:$0xff] %v44
  %s48 = scalar_lea.vmem %s0, 80
  %v49 = vld [vmem:[%s48] sm:$0xff]
  %50 = xla_tuple %v49
  %51 = xla_tuple %50
  %v52 = vxor.u32 %v49, 2147483648
  %53 = xla_tuple %v52
  %s54 = scalar_lea.vmem %s1, 80
  %55 = vst [vmem:[%s54] sm:$0xff] %v52
  %s56 = scalar_lea.vmem %s0, 112
  %v57 = vld [vmem:[%s56] sm:$0xff]
  %58 = xla_tuple %v57
  %59 = xla_tuple %58
  %v60 = vxor.u32 %v57, 2147483648
  %61 = xla_tuple %v60
  %s62 = scalar_lea.vmem %s1, 112
  %63 = vst [vmem:[%s62] sm:$0xff] %v60
  %s64 = scalar_lea.vmem %s0, 8
  %v65 = vld [vmem:[%s64] sm:$0xff]
  %66 = xla_tuple %v65
  %67 = xla_tuple %66
  %v68 = vxor.u32 %v65, 2147483648
  %69 = xla_tuple %v68
  %s70 = scalar_lea.vmem %s1, 8
  %71 = vst [vmem:[%s70] sm:$0xff] %v68
  %s72 = scalar_lea.vmem %s0, 40
  %v73 = vld [vmem:[%s72] sm:$0xff]
  %74 = xla_tuple %v73
  %75 = xla_tuple %74
  %v76 = vxor.u32 %v73, 2147483648
  %77 = xla_tuple %v76
  %s78 = scalar_lea.vmem %s1, 40
  %79 = vst [vmem:[%s78] sm:$0xff] %v76
  %s80 = scalar_lea.vmem %s0, 72
  %v81 = vld [vmem:[%s80] sm:$0xff]
  %82 = xla_tuple %v81
  %83 = xla_tuple %82
  %v84 = vxor.u32 %v81, 2147483648
  %85 = xla_tuple %v84
  %s86 = scalar_lea.vmem %s1, 72
  %87 = vst [vmem:[%s86] sm:$0xff] %v84
  %s88 = scalar_lea.vmem %s0, 104
  %v89 = vld [vmem:[%s88] sm:$0xff]
  %90 = xla_tuple %v89
  %91 = xla_tuple %90
  %v92 = vxor.u32 %v89, 2147483648
  %93 = xla_tuple %v92
  %s94 = scalar_lea.vmem %s1, 104
  %95 = vst [vmem:[%s94] sm:$0xff] %v92
  %s96 = scalar_lea.vmem %s0, 24
  %v97 = vld [vmem:[%s96] sm:$0xff]
  %98 = xla_tuple %v97
  %99 = xla_tuple %98
  %v100 = vxor.u32 %v97, 2147483648
  %101 = xla_tuple %v100
  %s102 = scalar_lea.vmem %s1, 24
  %103 = vst [vmem:[%s102] sm:$0xff] %v100
  %s104 = scalar_lea.vmem %s0, 56
  %v105 = vld [vmem:[%s104] sm:$0xff]
  %106 = xla_tuple %v105
  %107 = xla_tuple %106
  %v108 = vxor.u32 %v105, 2147483648
  %109 = xla_tuple %v108
  %s110 = scalar_lea.vmem %s1, 56
  %111 = vst [vmem:[%s110] sm:$0xff] %v108
  %s112 = scalar_lea.vmem %s0, 88
  %v113 = vld [vmem:[%s112] sm:$0xff]
  %114 = xla_tuple %v113
  %115 = xla_tuple %114
  %v116 = vxor.u32 %v113, 2147483648
  %117 = xla_tuple %v116
  %s118 = scalar_lea.vmem %s1, 88
  %119 = vst [vmem:[%s118] sm:$0xff] %v116
  %s120 = scalar_lea.vmem %s0, 120
  %v121 = vld [vmem:[%s120] sm:$0xff]
  %122 = xla_tuple %v121
  %123 = xla_tuple %122
  %v124 = vxor.u32 %v121, 2147483648
  %125 = xla_tuple %v124
  %s126 = scalar_lea.vmem %s1, 120
  %127 = vst [vmem:[%s126] sm:$0xff] %v124

// kernel: criterion_par_forward.1
$region0: #{criterion_par_forward.1}
  #allocation0 [shape = 'u32[]', space=smem, size = 0x4, offset = 0x4, fixed_abs, tag = 'smem constant byte address 0x4 - core index']
  #allocation1 [shape = 'u32[144,128]{1,0:T(1,128)}', space=vmem, size = 0x12000, scoped, tag = 'internal scratch']
  %s0 = inlined_call_operand.vmem [shape: f32[2,4,8,8], index: 0, kind: input, shape index: {}]
  %s1 = inlined_call_operand.vmem [shape: f32[16,8], index: 1, kind: input, shape index: {}]
  %s2 = inlined_call_operand.vmem [shape: f32[8,16], index: 2, kind: input, shape index: {}]
  %s3 = inlined_call_operand.vmem [shape: s32[2,16,16], index: 3, kind: input, shape index: {}]
  %s4 = inlined_call_operand.vmem [shape: f32[4,2,16,16], index: 4, kind: output, shape index: {0}]
  %s5 = inlined_call_operand.vmem [shape: f32[2,16,16], index: 5, kind: output, shape index: {1}]
  %6 = xla_tuple %s4, %s5
  %s7 = sld [smem:[#allocation0]]
  $region91: #{criterion_par_forward.1} parent=0
    _
  %s9 = ssub.s32 1, %s7
  %s10 = scalar_select 0, %s9, %s7
  $region1: #{criterion_par_forward.1} parent=0
    #allocation2 [shape = 'u8[65536]{0}', space=vmem, size = 0x10000, scoped, tag = 'output window, operand 0']
    loop: start=0, step=1, limit=4
    $region2: #{criterion_par_forward.1} parent=1 // loop_pre_header
      _
    $region3: #{criterion_par_forward.1} parent=1 // loop_header
      %s12 = sphi 0, %s16
      %p13 = scmp.ge.s32.totalorder %s12, 4
      %s19 = sphi 0, %s31
      %s20 = sphi 0, %s27
      %s21 = sphi 0, %s19
      %s22 = sphi 0, %s20
      %s23 = sphi 0, %s21
      %s24 = sphi 0, %s22
      %s34 = sphi 0, %s36
      %s37 = sphi 0, %s34
      %s38 = sphi 0, %s37
      %s54 = sphi 0, %s38
      %s60 = sphi 0, %s62
      %s63 = sphi 0, %s60
      %s64 = sphi 0, %s63
      %s80 = sphi 0, %s64
      %s84 = sphi 0, %s84
      %s86 = sphi 0, %s84
      %s87 = sphi 0, %s86
      %s101 = sphi 0, %s87
      %s109 = sphi 0, %s111
      %s112 = sphi 0, %s109
      %s113 = sphi 0, %s112
      %s129 = sphi 0, %s113
      %s137 = sphi 0, %s139
      %s140 = sphi 0, %s137
      %s141 = sphi 0, %s140
      %s157 = sphi 0, %s141
      %s165 = sphi 0, %s167
      %s168 = sphi 0, %s165
      %s169 = sphi 0, %s168
      %s185 = sphi 0, %s169
    $region4: #{criterion_par_forward.1} parent=1 // loop_header_branch
      %15 = sbr.rel (%p13) target = $region8
    $region5: #{criterion_par_forward.1} parent=1 // loop_body
      %s17 = ssub.s32 %s12, 1
      %s18 = ssub.s32 %s12, 2
      %s25 = sadd.s32 1, %s20
      %p26 = scmp.ge.s32.totalorder %s25, 1
      %s27 = scalar_select %p26, 0, %s25
      %s28 = sadd.s32 1, %s19
      %s29 = scalar_select %p26, %s28, %s19
      %p30 = scmp.ge.s32.totalorder %s29, 2
      %s31 = scalar_select %p30, 0, %s29
      %s32 = ssub.s32 %s19, %s31
      %p33 = scmp.eq.s32.totalorder %s32, 0
      %s35 = sadd.s32 %s34, 1
      %s36 = scalar_select %p33, %s34, %s35
      %p39 = pneg %p33
      %p40 = scmp.eq.s32.totalorder %s12, 1
      %p41 = por %p39, %p40
      %p42 = scmp.ne.s32.totalorder %s34, %s37
      %p43 = scmp.eq.s32.totalorder %s12, 0
      %p44 = por %p42, %p43
      %p45 = scmp.ne.s32.totalorder %s34, %s37
      %p46 = scmp.eq.s32.totalorder %s17, 1
      %p47 = por %p45, %p46
      %p48 = scmp.ne.s32.totalorder %s37, %s38
      %p49 = scmp.eq.s32.totalorder %s17, 0
      %p50 = por %p48, %p49
      %p51 = scmp.ne.s32.totalorder %s37, %s38
      %p52 = scmp.eq.s32.totalorder %s18, 1
      %p53 = por %p51, %p52
      %p55 = scmp.ne.s32.totalorder %s38, %s54
      %p56 = scmp.eq.s32.totalorder %s18, 0
      %p57 = por %p55, %p56
      %s58 = ssub.s32 %s20, %s27
      %p59 = scmp.eq.s32.totalorder %s58, 0
      %s61 = sadd.s32 %s60, 1
      %s62 = scalar_select %p59, %s60, %s61
      %p65 = pneg %p59
      %p66 = scmp.eq.s32.totalorder %s12, 1
      %p67 = por %p65, %p66
      %p68 = scmp.ne.s32.totalorder %s60, %s63
      %p69 = scmp.eq.s32.totalorder %s12, 0
      %p70 = por %p68, %p69
      %p71 = scmp.ne.s32.totalorder %s60, %s63
      %p72 = scmp.eq.s32.totalorder %s17, 1
      %p73 = por %p71, %p72
      %p74 = scmp.ne.s32.totalorder %s63, %s64
      %p75 = scmp.eq.s32.totalorder %s17, 0
      %p76 = por %p74, %p75
      %p77 = scmp.ne.s32.totalorder %s63, %s64
      %p78 = scmp.eq.s32.totalorder %s18, 1
      %p79 = por %p77, %p78
      %p81 = scmp.ne.s32.totalorder %s64, %s80
      %p82 = scmp.eq.s32.totalorder %s18, 0
      %p83 = por %p81, %p82
      %s85 = sadd.s32 %s84, 1
      %p88 = scmp.eq.s32.totalorder %s12, 1
      %p89 = scmp.ne.s32.totalorder %s84, %s86
      %p90 = scmp.eq.s32.totalorder %s12, 0
      %p91 = por %p89, %p90
      %p92 = scmp.ne.s32.totalorder %s84, %s86
      %p93 = scmp.eq.s32.totalorder %s17, 1
      %p94 = por %p92, %p93
      %p95 = scmp.ne.s32.totalorder %s86, %s87
      %p96 = scmp.eq.s32.totalorder %s17, 0
      %p97 = por %p95, %p96
      %p98 = scmp.ne.s32.totalorder %s86, %s87
      %p99 = scmp.eq.s32.totalorder %s18, 1
      %p100 = por %p98, %p99
      %p102 = scmp.ne.s32.totalorder %s87, %s101
      %p103 = scmp.eq.s32.totalorder %s18, 0
      %p104 = por %p102, %p103
      %s105 = ssub.s32 %s19, %s31
      %s106 = ssub.s32 %s20, %s27
      %s107 = sor.u32 %s105, %s106
      %p108 = scmp.eq.s32.totalorder %s107, 0
      %s110 = sadd.s32 %s109, 1
      %s111 = scalar_select %p108, %s109, %s110
      %p114 = pneg %p108
      %p115 = scmp.eq.s32.totalorder %s12, 1
      %p116 = por %p114, %p115
      %p117 = scmp.ne.s32.totalorder %s109, %s112
      %p118 = scmp.eq.s32.totalorder %s12, 0
      %p119 = por %p117, %p118
      %p120 = scmp.ne.s32.totalorder %s109, %s112
      %p121 = scmp.eq.s32.totalorder %s17, 1
      %p122 = por %p120, %p121
      %p123 = scmp.ne.s32.totalorder %s112, %s113
      %p124 = scmp.eq.s32.totalorder %s17, 0
      %p125 = por %p123, %p124
      %p126 = scmp.ne.s32.totalorder %s112, %s113
      %p127 = scmp.eq.s32.totalorder %s18, 1
      %p128 = por %p126, %p127
      %p130 = scmp.ne.s32.totalorder %s113, %s129
      %p131 = scmp.eq.s32.totalorder %s18, 0
      %p132 = por %p130, %p131
      %s133 = ssub.s32 %s19, %s31
      %s134 = ssub.s32 %s20, %s27
      %s135 = sor.u32 %s133, %s134
      %p136 = scmp.eq.s32.totalorder %s135, 0
      %s138 = sadd.s32 %s137, 1
      %s139 = scalar_select %p136, %s137, %s138
      %p142 = pneg %p136
      %p143 = scmp.eq.s32.totalorder %s12, 1
      %p144 = por %p142, %p143
      %p145 = scmp.ne.s32.totalorder %s137, %s140
      %p146 = scmp.eq.s32.totalorder %s12, 0
      %p147 = por %p145, %p146
      %p148 = scmp.ne.s32.totalorder %s137, %s140
      %p149 = scmp.eq.s32.totalorder %s17, 1
      %p150 = por %p148, %p149
      %p151 = scmp.ne.s32.totalorder %s140, %s141
      %p152 = scmp.eq.s32.totalorder %s17, 0
      %p153 = por %p151, %p152
      %p154 = scmp.ne.s32.totalorder %s140, %s141
      %p155 = scmp.eq.s32.totalorder %s18, 1
      %p156 = por %p154, %p155
      %p158 = scmp.ne.s32.totalorder %s141, %s157
      %p159 = scmp.eq.s32.totalorder %s18, 0
      %p160 = por %p158, %p159
      %s161 = ssub.s32 %s19, %s31
      %s162 = ssub.s32 %s20, %s27
      %s163 = sor.u32 %s161, %s162
      %p164 = scmp.eq.s32.totalorder %s163, 0
      %s166 = sadd.s32 %s165, 1
      %s167 = scalar_select %p164, %s165, %s166
      %p170 = pneg %p164
      %p171 = scmp.eq.s32.totalorder %s12, 1
      %p172 = por %p170, %p171
      %p173 = scmp.ne.s32.totalorder %s165, %s168
      %p174 = scmp.eq.s32.totalorder %s12, 0
      %p175 = por %p173, %p174
      %p176 = scmp.ne.s32.totalorder %s165, %s168
      %p177 = scmp.eq.s32.totalorder %s17, 1
      %p178 = por %p176, %p177
      %p179 = scmp.ne.s32.totalorder %s168, %s169
      %p180 = scmp.eq.s32.totalorder %s17, 0
      %p181 = por %p179, %p180
      %p182 = scmp.ne.s32.totalorder %s168, %s169
      %p183 = scmp.eq.s32.totalorder %s18, 1
      %p184 = por %p182, %p183
      %p186 = scmp.ne.s32.totalorder %s169, %s185
      %p187 = scmp.eq.s32.totalorder %s18, 0
      %p188 = por %p186, %p187
      %p189 = scmp.le.s32.totalorder 1, %s12
      %p190 = scmp.lt.s32.totalorder %s12, 3
      %p191 = pnand %p189, %p190
      %p192 = pneg %p191
      // Predicated region
      $region9: #{criterion_par_forward.1} parent=5 // pred_check
        _
      $region10: #{criterion_par_forward.1} parent=5 // pred_check_branch
        %194 = sbr.rel (%p191) target = $region12
      $region11: #{criterion_par_forward.1} parent=5 // pred_region
        %s195 = ssub.s32 %s12, 1
        // Predicated region
        $region13: #{criterion_par_forward.1} parent=11 // pred_check
          %p196 = pneg %p76
        $region14: #{criterion_par_forward.1} parent=11 // pred_check_branch
          %198 = sbr.rel (%p196) target = $region16
        $region15: #{criterion_par_forward.1} parent=11 // pred_region
          %s199 = smul.u32 2, %s22
          %p200 = scmp.lt.s32.totalorder %s199, 1
          %s201 = scalar_select %p200, %s199, 1
          %s202 = smul.addr %s201, 8
          %s203 = scalar_lea.vmem %s1, %s202
          %s204 = smul.u32 2, %s22
        $region16: #{criterion_par_forward.1} parent=11 // pred_fallthru
          _
        // Predicated region
        $region17: #{criterion_par_forward.1} parent=11 // pred_check
          %p205 = pneg %p97
        $region18: #{criterion_par_forward.1} parent=11 // pred_check_branch
          %207 = sbr.rel (%p205) target = $region20
        $region19: #{criterion_par_forward.1} parent=11 // pred_region
          _
        $region20: #{criterion_par_forward.1} parent=11 // pred_fallthru
          _
      $region12: #{criterion_par_forward.1} parent=5 // pred_fallthru
        _
      %p208 = scmp.lt.s32.totalorder %s12, 2
      // Predicated region
      $region21: #{criterion_par_forward.1} parent=5 // pred_check
        %p209 = pneg %p208
      $region22: #{criterion_par_forward.1} parent=5 // pred_check_branch
        %211 = sbr.rel (%p209) target = $region24
      $region23: #{criterion_par_forward.1} parent=5 // pred_region
        // Predicated region
        $region25: #{criterion_par_forward.1} parent=23 // pred_check
          %p212 = pneg %p44
        $region26: #{criterion_par_forward.1} parent=23 // pred_check_branch
          %214 = sbr.rel (%p212) target = $region28
        $region27: #{criterion_par_forward.1} parent=23 // pred_region
          %p215 = scmp.lt.s32.totalorder %s19, 1
          %s216 = scalar_select %p215, %s19, 1
          %s217 = smul.addr %s216, 4
          %s218 = smul.addr %s217, 8
          %s219 = scalar_lea.vmem %s0, %s218
        $region28: #{criterion_par_forward.1} parent=23 // pred_fallthru
          _
        // Predicated region
        $region29: #{criterion_par_forward.1} parent=23 // pred_check
          %p220 = pneg %p119
        $region30: #{criterion_par_forward.1} parent=23 // pred_check_branch
          %222 = sbr.rel (%p220) target = $region32
        $region31: #{criterion_par_forward.1} parent=23 // pred_region
          %s223 = smul.u32 2, %s20
          %p224 = scmp.lt.s32.totalorder %s19, 1
          %s225 = scalar_select %p224, %s19, 1
          %p226 = scmp.lt.s32.totalorder %s223, 1
          %s227 = scalar_select %p226, %s223, 1
          %s228 = smul.addr %s225, 2
          %s229 = sadd.s32 %s227, %s228
          %s230 = smul.addr %s229, 8
          %s231 = scalar_lea.vmem %s3, %s230
          %s232 = smul.u32 2, %s20
        $region32: #{criterion_par_forward.1} parent=23 // pred_fallthru
          _
      $region24: #{criterion_par_forward.1} parent=5 // pred_fallthru
        _
      %p233 = scmp.le.s32.totalorder 1, %s12
      %p234 = scmp.lt.s32.totalorder %s12, 3
      %p235 = pnand %p233, %p234
      %p236 = pneg %p235
      // Predicated region
      $region33: #{criterion_par_forward.1} parent=5 // pred_check
        _
      $region34: #{criterion_par_forward.1} parent=5 // pred_check_branch
        %238 = sbr.rel (%p235) target = $region36
      $region35: #{criterion_par_forward.1} parent=5 // pred_region
        %s239 = ssub.s32 %s12, 1
        %p240 = scmp.lt.s32.totalorder %s21, 1
        %s241 = scalar_select %p240, %s21, 1
        %s242 = smul.addr %s241, 4
        %s243 = smul.addr %s242, 8
        %s244 = scalar_lea.vmem %s0, %s243
        %p245 = pneg %p50
        %p246 = pneg %p47
        %s247 = smul.u32 2, %s22
        %p248 = scmp.lt.s32.totalorder %s247, 1
        %s249 = scalar_select %p248, %s247, 1
        %s250 = smul.addr %s249, 8
        %s251 = scalar_lea.vmem %s1, %s250
        %p252 = pneg %p76
        %p253 = pneg %p73
        %p254 = pneg %p97
        %p255 = pneg %p94
        %s256 = smul.u32 2, %s22
        %p257 = scmp.lt.s32.totalorder %s21, 1
        %s258 = scalar_select %p257, %s21, 1
        %p259 = scmp.lt.s32.totalorder %s256, 1
        %s260 = scalar_select %p259, %s256, 1
        %s261 = smul.addr %s258, 2
        %s262 = sadd.s32 %s260, %s261
        %s263 = smul.addr %s262, 8
        %s264 = scalar_lea.vmem %s3, %s263
        %p265 = pneg %p125
        %p266 = pneg %p122
        %p267 = pneg %p153
        %p268 = pneg %p150
        %s269 = sand.u32 %s140, 1
        %s270 = sand.u32 %s140, 1
        %s271 = smul.addr %s270, 64
        %s272 = scalar_lea.vmem [#allocation2], %s271
        %p273 = pneg %p181
        %p274 = pneg %p178
        %s275 = smul.u32 2, %s22
        %p276 = scmp.lt.s32.totalorder %s21, 1
        %s277 = scalar_select %p276, %s21, 1
        %p278 = scmp.lt.s32.totalorder %s275, 1
        %s279 = scalar_select %p278, %s275, 1
        %s280 = smul.addr %s277, 2
        %s281 = sadd.s32 %s279, %s280
        %s282 = smul.addr %s281, 8
        %s283 = scalar_lea.vmem %s5, %s282
        %p284 = scmp.lt.s32.totalorder %s21, 1
        %s285 = scalar_select %p284, %s21, 1
        %s286 = smul.addr %s285, 4
        %s287 = smul.addr %s286, 8
        %s288 = scalar_lea.vmem %s0, %s287
        %s289 = smul.u32 2, %s22
        %p290 = scmp.lt.s32.totalorder %s289, 1
        %s291 = scalar_select %p290, %s289, 1
        %s292 = smul.addr %s291, 8
        %s293 = scalar_lea.vmem %s1, %s292
        %s294 = smul.u32 2, %s22
        %s295 = smul.u32 2, %s22
        %p296 = scmp.lt.s32.totalorder %s21, 1
        %s297 = scalar_select %p296, %s21, 1
        %p298 = scmp.lt.s32.totalorder %s295, 1
        %s299 = scalar_select %p298, %s295, 1
        %s300 = smul.addr %s297, 2
        %s301 = sadd.s32 %s299, %s300
        %s302 = smul.addr %s301, 8
        %s303 = scalar_lea.vmem %s3, %s302
        %s304 = smul.u32 2, %s22
        %s305 = smul.u32 2, %s22
        %s306 = smul.u32 2, %s22
        %p307 = scmp.lt.s32.totalorder %s21, 1
        %s308 = scalar_select %p307, %s21, 1
        %p309 = scmp.lt.s32.totalorder %s306, 1
        %s310 = scalar_select %p309, %s306, 1
        %s311 = smul.addr %s308, 2
        %s312 = sadd.s32 %s310, %s311
        %s313 = smul.addr %s312, 8
        %s314 = scalar_lea.vmem %s5, %s313
        %s315 = smul.u32 2, %s22
        %v316 = vld [vmem:[%s288] sm:$0xff]
        %v317 = vld [vmem:[%s288 + $0x8] sm:$0xff]
        %v318 = vld [vmem:[%s288 + $0x10] sm:$0xff]
        %v319 = vld [vmem:[%s288 + $0x18] sm:$0xff]
        %v320 = vld [vmem:[%s293] sm:$0xff]
        %v321 = vld [vmem:[%s293 + $0x8] sm:$0xff]
        %v322 = vld [vmem:[%s2] sm:$0xff]
        %v323 = vld [vmem:[%s303] sm:$0xff]
        %v324 = vld [vmem:[%s303 + $0x8] sm:$0xff]
        %vm325 = vcmp.ne.s32.totalorder %v323, 255
        %vm326 = vcmp.ne.s32.totalorder %v324, 255
        %vm327 = vcmask 64512
        %v329 = vsel %vm327, %v320, 0
        %v332 = vsel %vm327, %v321, 0
        %334 = vmatprep.subr.mxu0 0.0
        %335 = vmatpush1.msra.mxu0 %v316
        %336 = vmatprep.subr.mxu0 0.0
        %337 = vmatpush1.msra.mxu0 0.0
        %338 = vmatprep.subr.mxu0 0.0
        %339 = vmatpush1.msra.mxu0 0.0
        %340 = vmatprep.subr.mxu0 0.0
        %341 = vmatpush1.msra.mxu0 0.0
        %342 = vmatprep.subr.mxu0 0.0
        %343 = vmatpush1.msra.mxu0 0.0
        %344 = vmatprep.subr.mxu0 0.0
        %345 = vmatpush1.msra.mxu0 0.0
        %346 = vmatprep.subr.mxu0 0.0
        %347 = vmatpush1.msra.mxu0 0.0
        %348 = vmatprep.subr.mxu0 0.0
        %349 = vmatpush1.msra.mxu0 0.0
        %350 = vmatprep.subr.mxu0 0.0
        %351 = vmatpush1.msra.mxu0 0.0
        %352 = vmatprep.subr.mxu0 0.0
        %353 = vmatpush1.msra.mxu0 0.0
        %354 = vmatprep.subr.mxu0 0.0
        %355 = vmatpush1.msra.mxu0 0.0
        %356 = vmatprep.subr.mxu0 0.0
        %357 = vmatpush1.msra.mxu0 0.0
        %358 = vmatprep.subr.mxu0 0.0
        %359 = vmatpush1.msra.mxu0 0.0
        %360 = vmatprep.subr.mxu0 0.0
        %361 = vmatpush1.msra.mxu0 0.0
        %362 = vmatprep.subr.mxu0 0.0
        %363 = vmatpush1.msra.mxu0 0.0
        %364 = vmatprep.subr.mxu0 0.0
        %365 = vmatpush1.msra.mxu0 0.0
        %366 = vmatprep.subr.mxu0 0.0
        %367 = vmatpush1.msra.mxu0 0.0
        %368 = vmatprep.subr.mxu0 0.0
        %369 = vmatpush1.msra.mxu0 0.0
        %370 = vmatprep.subr.mxu0 0.0
        %371 = vmatpush1.msra.mxu0 0.0
        %372 = vmatprep.subr.mxu0 0.0
        %373 = vmatpush1.msra.mxu0 0.0
        %374 = vmatprep.subr.mxu0 0.0
        %375 = vmatpush1.msra.mxu0 0.0
        %376 = vmatprep.subr.mxu0 0.0
        %377 = vmatpush1.msra.mxu0 0.0
        %378 = vmatprep.subr.mxu0 0.0
        %379 = vmatpush1.msra.mxu0 0.0
        %380 = vmatprep.subr.mxu0 0.0
        %381 = vmatpush1.msra.mxu0 0.0
        %382 = vmatprep.subr.mxu0 0.0
        %383 = vmatpush1.msra.mxu0 0.0
        %384 = vmatprep.subr.mxu0 0.0
        %385 = vmatpush1.msra.mxu0 0.0
        %386 = vmatprep.subr.mxu0 0.0
        %387 = vmatpush1.msra.mxu0 0.0
        %388 = vmatprep.subr.mxu0 0.0
        %389 = vmatpush1.msra.mxu0 0.0
        %390 = vmatprep.subr.mxu0 0.0
        %391 = vmatpush1.msra.mxu0 0.0
        %392 = vmatprep.subr.mxu0 0.0
        %393 = vmatpush1.msra.mxu0 0.0
        %394 = vmatprep.subr.mxu0 0.0
        %395 = vmatpush1.msra.mxu0 0.0
        %396 = vmatprep.subr.mxu0 0.0
        %397 = vmatpush1.msra.mxu0 0.0
        %398 = vmatprep.mubr.f32.mxu0 0.0
        %399 = vmatmul.mubr.f32.gmra.mrb[0].mxu0 %v329
        %v400 = vpop.f32.mrb[0].mxu0
        %v401 = vadd.f32 0.0, %v400
        %v402 = vpop.f32.mrb[0].mxu0
        %403 = vmatprep.mubr.f32.mxu0 0.0
        %404 = vmatmul.mubr.f32.gmra.mrb[0].mxu0 %v332
        %v405 = vpop.f32.mrb[0].mxu0
        %v406 = vadd.f32 0.0, %v405
        %v407 = vpop.f32.mrb[0].mxu0
        %408 = vdwg.mxu0
        %v410 = vsel %vm327, %v401, 0
        %v413 = vsel %vm327, %v406, 0
        %415 = vmatprep.subr.mxu0 0.0
        %416 = vmatpush1.msra.mxu0 %v322
        %417 = vmatprep.subr.mxu0 0.0
        %418 = vmatpush1.msra.mxu0 0.0
        %419 = vmatprep.subr.mxu0 0.0
        %420 = vmatpush1.msra.mxu0 0.0
        %421 = vmatprep.subr.mxu0 0.0
        %422 = vmatpush1.msra.mxu0 0.0
        %423 = vmatprep.subr.mxu0 0.0
        %424 = vmatpush1.msra.mxu0 0.0
        %425 = vmatprep.subr.mxu0 0.0
        %426 = vmatpush1.msra.mxu0 0.0
        %427 = vmatprep.subr.mxu0 0.0
        %428 = vmatpush1.msra.mxu0 0.0
        %429 = vmatprep.subr.mxu0 0.0
        %430 = vmatpush1.msra.mxu0 0.0
        %431 = vmatprep.subr.mxu0 0.0
        %432 = vmatpush1.msra.mxu0 0.0
        %433 = vmatprep.subr.mxu0 0.0
        %434 = vmatpush1.msra.mxu0 0.0
        %435 = vmatprep.subr.mxu0 0.0
        %436 = vmatpush1.msra.mxu0 0.0
        %437 = vmatprep.subr.mxu0 0.0
        %438 = vmatpush1.msra.mxu0 0.0
        %439 = vmatprep.subr.mxu0 0.0
        %440 = vmatpush1.msra.mxu0 0.0
        %441 = vmatprep.subr.mxu0 0.0
        %442 = vmatpush1.msra.mxu0 0.0
        %443 = vmatprep.subr.mxu0 0.0
        %444 = vmatpush1.msra.mxu0 0.0
        %445 = vmatprep.subr.mxu0 0.0
        %446 = vmatpush1.msra.mxu0 0.0
        %447 = vmatprep.subr.mxu0 0.0
        %448 = vmatpush1.msra.mxu0 0.0
        %449 = vmatprep.subr.mxu0 0.0
        %450 = vmatpush1.msra.mxu0 0.0
        %451 = vmatprep.subr.mxu0 0.0
        %452 = vmatpush1.msra.mxu0 0.0
        %453 = vmatprep.subr.mxu0 0.0
        %454 = vmatpush1.msra.mxu0 0.0
        %455 = vmatprep.subr.mxu0 0.0
        %456 = vmatpush1.msra.mxu0 0.0
        %457 = vmatprep.subr.mxu0 0.0
        %458 = vmatpush1.msra.mxu0 0.0
        %459 = vmatprep.subr.mxu0 0.0
        %460 = vmatpush1.msra.mxu0 0.0
        %461 = vmatprep.subr.mxu0 0.0
        %462 = vmatpush1.msra.mxu0 0.0
        %463 = vmatprep.subr.mxu0 0.0
        %464 = vmatpush1.msra.mxu0 0.0
        %465 = vmatprep.subr.mxu0 0.0
        %466 = vmatpush1.msra.mxu0 0.0
        %467 = vmatprep.subr.mxu0 0.0
        %468 = vmatpush1.msra.mxu0 0.0
        %469 = vmatprep.subr.mxu0 0.0
        %470 = vmatpush1.msra.mxu0 0.0
        %471 = vmatprep.subr.mxu0 0.0
        %472 = vmatpush1.msra.mxu0 0.0
        %473 = vmatprep.subr.mxu0 0.0
        %474 = vmatpush1.msra.mxu0 0.0
        %475 = vmatprep.subr.mxu0 0.0
        %476 = vmatpush1.msra.mxu0 0.0
        %477 = vmatprep.subr.mxu0 0.0
        %478 = vmatpush1.msra.mxu0 0.0
        %479 = vmatprep.mubr.f32.mxu0 0.0
        %480 = vmatmul.mubr.f32.gmra.mrb[0].mxu0 %v410
        %v481 = vpop.f32.mrb[0].mxu0
        %v482 = vadd.f32 0.0, %v481
        %v483 = vpop.f32.mrb[0].mxu0
        %484 = vmatprep.mubr.f32.mxu0 0.0
        %485 = vmatmul.mubr.f32.gmra.mrb[0].mxu0 %v413
        %v486 = vpop.f32.mrb[0].mxu0
        %v487 = vadd.f32 0.0, %v486
        %v488 = vpop.f32.mrb[0].mxu0
        %489 = vdwg.mxu0
        %490 = vmatprep.subr.mxu0 0.0
        %491 = vmatpush1.msra.mxu0 %v317
        %492 = vmatprep.subr.mxu0 0.0
        %493 = vmatpush1.msra.mxu0 0.0
        %494 = vmatprep.subr.mxu0 0.0
        %495 = vmatpush1.msra.mxu0 0.0
        %496 = vmatprep.subr.mxu0 0.0
        %497 = vmatpush1.msra.mxu0 0.0
        %498 = vmatprep.subr.mxu0 0.0
        %499 = vmatpush1.msra.mxu0 0.0
        %500 = vmatprep.subr.mxu0 0.0
        %501 = vmatpush1.msra.mxu0 0.0
        %502 = vmatprep.subr.mxu0 0.0
        %503 = vmatpush1.msra.mxu0 0.0
        %504 = vmatprep.subr.mxu0 0.0
        %505 = vmatpush1.msra.mxu0 0.0
        %506 = vmatprep.subr.mxu0 0.0
        %507 = vmatpush1.msra.mxu0 0.0
        %508 = vmatprep.subr.mxu0 0.0
        %509 = vmatpush1.msra.mxu0 0.0
        %510 = vmatprep.subr.mxu0 0.0
        %511 = vmatpush1.msra.mxu0 0.0
        %512 = vmatprep.subr.mxu0 0.0
        %513 = vmatpush1.msra.mxu0 0.0
        %514 = vmatprep.subr.mxu0 0.0
        %515 = vmatpush1.msra.mxu0 0.0
        %516 = vmatprep.subr.mxu0 0.0
        %517 = vmatpush1.msra.mxu0 0.0
        %518 = vmatprep.subr.mxu0 0.0
        %519 = vmatpush1.msra.mxu0 0.0
        %520 = vmatprep.subr.mxu0 0.0
        %521 = vmatpush1.msra.mxu0 0.0
        %522 = vmatprep.subr.mxu0 0.0
        %523 = vmatpush1.msra.mxu0 0.0
        %524 = vmatprep.subr.mxu0 0.0
        %525 = vmatpush1.msra.mxu0 0.0
        %526 = vmatprep.subr.mxu0 0.0
        %527 = vmatpush1.msra.mxu0 0.0
        %528 = vmatprep.subr.mxu0 0.0
        %529 = vmatpush1.msra.mxu0 0.0
        %530 = vmatprep.subr.mxu0 0.0
        %531 = vmatpush1.msra.mxu0 0.0
        %532 = vmatprep.subr.mxu0 0.0
        %533 = vmatpush1.msra.mxu0 0.0
        %534 = vmatprep.subr.mxu0 0.0
        %535 = vmatpush1.msra.mxu0 0.0
        %536 = vmatprep.subr.mxu0 0.0
        %537 = vmatpush1.msra.mxu0 0.0
        %538 = vmatprep.subr.mxu0 0.0
        %539 = vmatpush1.msra.mxu0 0.0
        %540 = vmatprep.subr.mxu0 0.0
        %541 = vmatpush1.msra.mxu0 0.0
        %542 = vmatprep.subr.mxu0 0.0
        %543 = vmatpush1.msra.mxu0 0.0
        %544 = vmatprep.subr.mxu0 0.0
        %545 = vmatpush1.msra.mxu0 0.0
        %546 = vmatprep.subr.mxu0 0.0
        %547 = vmatpush1.msra.mxu0 0.0
        %548 = vmatprep.subr.mxu0 0.0
        %549 = vmatpush1.msra.mxu0 0.0
        %550 = vmatprep.subr.mxu0 0.0
        %551 = vmatpush1.msra.mxu0 0.0
        %552 = vmatprep.subr.mxu0 0.0
        %553 = vmatpush1.msra.mxu0 0.0
        %554 = vmatprep.mubr.f32.mxu0 0.0
        %555 = vmatmul.mubr.f32.gmra.mrb[0].mxu0 %v329
        %v556 = vpop.f32.mrb[0].mxu0
        %v557 = vadd.f32 0.0, %v556
        %v558 = vpop.f32.mrb[0].mxu0
        %559 = vmatprep.mubr.f32.mxu0 0.0
        %560 = vmatmul.mubr.f32.gmra.mrb[0].mxu0 %v332
        %v561 = vpop.f32.mrb[0].mxu0
        %v562 = vadd.f32 0.0, %v561
        %v563 = vpop.f32.mrb[0].mxu0
        %564 = vdwg.mxu0
        %v566 = vsel %vm327, %v557, 0
        %v569 = vsel %vm327, %v562, 0
        %571 = vmatprep.subr.mxu0 0.0
        %572 = vmatpush1.msra.mxu0 %v322
        %573 = vmatprep.subr.mxu0 0.0
        %574 = vmatpush1.msra.mxu0 0.0
        %575 = vmatprep.subr.mxu0 0.0
        %576 = vmatpush1.msra.mxu0 0.0
        %577 = vmatprep.subr.mxu0 0.0
        %578 = vmatpush1.msra.mxu0 0.0
        %579 = vmatprep.subr.mxu0 0.0
        %580 = vmatpush1.msra.mxu0 0.0
        %581 = vmatprep.subr.mxu0 0.0
        %582 = vmatpush1.msra.mxu0 0.0
        %583 = vmatprep.subr.mxu0 0.0
        %584 = vmatpush1.msra.mxu0 0.0
        %585 = vmatprep.subr.mxu0 0.0
        %586 = vmatpush1.msra.mxu0 0.0
        %587 = vmatprep.subr.mxu0 0.0
        %588 = vmatpush1.msra.mxu0 0.0
        %589 = vmatprep.subr.mxu0 0.0
        %590 = vmatpush1.msra.mxu0 0.0
        %591 = vmatprep.subr.mxu0 0.0
        %592 = vmatpush1.msra.mxu0 0.0
        %593 = vmatprep.subr.mxu0 0.0
        %594 = vmatpush1.msra.mxu0 0.0
        %595 = vmatprep.subr.mxu0 0.0
        %596 = vmatpush1.msra.mxu0 0.0
        %597 = vmatprep.subr.mxu0 0.0
        %598 = vmatpush1.msra.mxu0 0.0
        %599 = vmatprep.subr.mxu0 0.0
        %600 = vmatpush1.msra.mxu0 0.0
        %601 = vmatprep.subr.mxu0 0.0
        %602 = vmatpush1.msra.mxu0 0.0
        %603 = vmatprep.subr.mxu0 0.0
        %604 = vmatpush1.msra.mxu0 0.0
        %605 = vmatprep.subr.mxu0 0.0
        %606 = vmatpush1.msra.mxu0 0.0
        %607 = vmatprep.subr.mxu0 0.0
        %608 = vmatpush1.msra.mxu0 0.0
        %609 = vmatprep.subr.mxu0 0.0
        %610 = vmatpush1.msra.mxu0 0.0
        %611 = vmatprep.subr.mxu0 0.0
        %612 = vmatpush1.msra.mxu0 0.0
        %613 = vmatprep.subr.mxu0 0.0
        %614 = vmatpush1.msra.mxu0 0.0
        %615 = vmatprep.subr.mxu0 0.0
        %616 = vmatpush1.msra.mxu0 0.0
        %617 = vmatprep.subr.mxu0 0.0
        %618 = vmatpush1.msra.mxu0 0.0
        %619 = vmatprep.subr.mxu0 0.0
        %620 = vmatpush1.msra.mxu0 0.0
        %621 = vmatprep.subr.mxu0 0.0
        %622 = vmatpush1.msra.mxu0 0.0
        %623 = vmatprep.subr.mxu0 0.0
        %624 = vmatpush1.msra.mxu0 0.0
        %625 = vmatprep.subr.mxu0 0.0
        %626 = vmatpush1.msra.mxu0 0.0
        %627 = vmatprep.subr.mxu0 0.0
        %628 = vmatpush1.msra.mxu0 0.0
        %629 = vmatprep.subr.mxu0 0.0
        %630 = vmatpush1.msra.mxu0 0.0
        %631 = vmatprep.subr.mxu0 0.0
        %632 = vmatpush1.msra.mxu0 0.0
        %633 = vmatprep.subr.mxu0 0.0
        %634 = vmatpush1.msra.mxu0 0.0
        %635 = vmatprep.mubr.f32.mxu0 0.0
        %636 = vmatmul.mubr.f32.gmra.mrb[0].mxu0 %v566
        %v637 = vpop.f32.mrb[0].mxu0
        %v638 = vadd.f32 0.0, %v637
        %v639 = vpop.f32.mrb[0].mxu0
        %640 = vmatprep.mubr.f32.mxu0 0.0
        %641 = vmatmul.mubr.f32.gmra.mrb[0].mxu0 %v569
        %v642 = vpop.f32.mrb[0].mxu0
        %v643 = vadd.f32 0.0, %v642
        %v644 = vpop.f32.mrb[0].mxu0
        %645 = vdwg.mxu0
        %646 = vmatprep.subr.mxu0 0.0
        %647 = vmatpush1.msra.mxu0 %v318
        %648 = vmatprep.subr.mxu0 0.0
        %649 = vmatpush1.msra.mxu0 0.0
        %650 = vmatprep.subr.mxu0 0.0
        %651 = vmatpush1.msra.mxu0 0.0
        %652 = vmatprep.subr.mxu0 0.0
        %653 = vmatpush1.msra.mxu0 0.0
        %654 = vmatprep.subr.mxu0 0.0
        %655 = vmatpush1.msra.mxu0 0.0
        %656 = vmatprep.subr.mxu0 0.0
        %657 = vmatpush1.msra.mxu0 0.0
        %658 = vmatprep.subr.mxu0 0.0
        %659 = vmatpush1.msra.mxu0 0.0
        %660 = vmatprep.subr.mxu0 0.0
        %661 = vmatpush1.msra.mxu0 0.0
        %662 = vmatprep.subr.mxu0 0.0
        %663 = vmatpush1.msra.mxu0 0.0
        %664 = vmatprep.subr.mxu0 0.0
        %665 = vmatpush1.msra.mxu0 0.0
        %666 = vmatprep.subr.mxu0 0.0
        %667 = vmatpush1.msra.mxu0 0.0
        %668 = vmatprep.subr.mxu0 0.0
        %669 = vmatpush1.msra.mxu0 0.0
        %670 = vmatprep.subr.mxu0 0.0
        %671 = vmatpush1.msra.mxu0 0.0
        %672 = vmatprep.subr.mxu0 0.0
        %673 = vmatpush1.msra.mxu0 0.0
        %674 = vmatprep.subr.mxu0 0.0
        %675 = vmatpush1.msra.mxu0 0.0
        %676 = vmatprep.subr.mxu0 0.0
        %677 = vmatpush1.msra.mxu0 0.0
        %678 = vmatprep.subr.mxu0 0.0
        %679 = vmatpush1.msra.mxu0 0.0
        %680 = vmatprep.subr.mxu0 0.0
        %681 = vmatpush1.msra.mxu0 0.0
        %682 = vmatprep.subr.mxu0 0.0
        %683 = vmatpush1.msra.mxu0 0.0
        %684 = vmatprep.subr.mxu0 0.0
        %685 = vmatpush1.msra.mxu0 0.0
        %686 = vmatprep.subr.mxu0 0.0
        %687 = vmatpush1.msra.mxu0 0.0
        %688 = vmatprep.subr.mxu0 0.0
        %689 = vmatpush1.msra.mxu0 0.0
        %690 = vmatprep.subr.mxu0 0.0
        %691 = vmatpush1.msra.mxu0 0.0
        %692 = vmatprep.subr.mxu0 0.0
        %693 = vmatpush1.msra.mxu0 0.0
        %694 = vmatprep.subr.mxu0 0.0
        %695 = vmatpush1.msra.mxu0 0.0
        %696 = vmatprep.subr.mxu0 0.0
        %697 = vmatpush1.msra.mxu0 0.0
        %698 = vmatprep.subr.mxu0 0.0
        %699 = vmatpush1.msra.mxu0 0.0
        %700 = vmatprep.subr.mxu0 0.0
        %701 = vmatpush1.msra.mxu0 0.0
        %702 = vmatprep.subr.mxu0 0.0
        %703 = vmatpush1.msra.mxu0 0.0
        %704 = vmatprep.subr.mxu0 0.0
        %705 = vmatpush1.msra.mxu0 0.0
        %706 = vmatprep.subr.mxu0 0.0
        %707 = vmatpush1.msra.mxu0 0.0
        %708 = vmatprep.subr.mxu0 0.0
        %709 = vmatpush1.msra.mxu0 0.0
        %710 = vmatprep.mubr.f32.mxu0 0.0
        %711 = vmatmul.mubr.f32.gmra.mrb[0].mxu0 %v329
        %v712 = vpop.f32.mrb[0].mxu0
        %v713 = vadd.f32 0.0, %v712
        %v714 = vpop.f32.mrb[0].mxu0
        %715 = vmatprep.mubr.f32.mxu0 0.0
        %716 = vmatmul.mubr.f32.gmra.mrb[0].mxu0 %v332
        %v717 = vpop.f32.mrb[0].mxu0
        %v718 = vadd.f32 0.0, %v717
        %v719 = vpop.f32.mrb[0].mxu0
        %720 = vdwg.mxu0
        %v722 = vsel %vm327, %v713, 0
        %v725 = vsel %vm327, %v718, 0
        %727 = vmatprep.subr.mxu0 0.0
        %728 = vmatpush1.msra.mxu0 %v322
        %729 = vmatprep.subr.mxu0 0.0
        %730 = vmatpush1.msra.mxu0 0.0
        %731 = vmatprep.subr.mxu0 0.0
        %732 = vmatpush1.msra.mxu0 0.0
        %733 = vmatprep.subr.mxu0 0.0
        %734 = vmatpush1.msra.mxu0 0.0
        %735 = vmatprep.subr.mxu0 0.0
        %736 = vmatpush1.msra.mxu0 0.0
        %737 = vmatprep.subr.mxu0 0.0
        %738 = vmatpush1.msra.mxu0 0.0
        %739 = vmatprep.subr.mxu0 0.0
        %740 = vmatpush1.msra.mxu0 0.0
        %741 = vmatprep.subr.mxu0 0.0
        %742 = vmatpush1.msra.mxu0 0.0
        %743 = vmatprep.subr.mxu0 0.0
        %744 = vmatpush1.msra.mxu0 0.0
        %745 = vmatprep.subr.mxu0 0.0
        %746 = vmatpush1.msra.mxu0 0.0
        %747 = vmatprep.subr.mxu0 0.0
        %748 = vmatpush1.msra.mxu0 0.0
        %749 = vmatprep.subr.mxu0 0.0
        %750 = vmatpush1.msra.mxu0 0.0
        %751 = vmatprep.subr.mxu0 0.0
        %752 = vmatpush1.msra.mxu0 0.0
        %753 = vmatprep.subr.mxu0 0.0
        %754 = vmatpush1.msra.mxu0 0.0
        %755 = vmatprep.subr.mxu0 0.0
        %756 = vmatpush1.msra.mxu0 0.0
        %757 = vmatprep.subr.mxu0 0.0
        %758 = vmatpush1.msra.mxu0 0.0
        %759 = vmatprep.subr.mxu0 0.0
        %760 = vmatpush1.msra.mxu0 0.0
        %761 = vmatprep.subr.mxu0 0.0
        %762 = vmatpush1.msra.mxu0 0.0
        %763 = vmatprep.subr.mxu0 0.0
        %764 = vmatpush1.msra.mxu0 0.0
        %765 = vmatprep.subr.mxu0 0.0
        %766 = vmatpush1.msra.mxu0 0.0
        %767 = vmatprep.subr.mxu0 0.0
        %768 = vmatpush1.msra.mxu0 0.0
        %769 = vmatprep.subr.mxu0 0.0
        %770 = vmatpush1.msra.mxu0 0.0
        %771 = vmatprep.subr.mxu0 0.0
        %772 = vmatpush1.msra.mxu0 0.0
        %773 = vmatprep.subr.mxu0 0.0
        %774 = vmatpush1.msra.mxu0 0.0
        %775 = vmatprep.subr.mxu0 0.0
        %776 = vmatpush1.msra.mxu0 0.0
        %777 = vmatprep.subr.mxu0 0.0
        %778 = vmatpush1.msra.mxu0 0.0
        %779 = vmatprep.subr.mxu0 0.0
        %780 = vmatpush1.msra.mxu0 0.0
        %781 = vmatprep.subr.mxu0 0.0
        %782 = vmatpush1.msra.mxu0 0.0
        %783 = vmatprep.subr.mxu0 0.0
        %784 = vmatpush1.msra.mxu0 0.0
        %785 = vmatprep.subr.mxu0 0.0
        %786 = vmatpush1.msra.mxu0 0.0
        %787 = vmatprep.subr.mxu0 0.0
        %788 = vmatpush1.msra.mxu0 0.0
        %789 = vmatprep.subr.mxu0 0.0
        %790 = vmatpush1.msra.mxu0 0.0
        %791 = vmatprep.mubr.f32.mxu0 0.0
        %792 = vmatmul.mubr.f32.gmra.mrb[0].mxu0 %v722
        %v793 = vpop.f32.mrb[0].mxu0
        %v794 = vadd.f32 0.0, %v793
        %v795 = vpop.f32.mrb[0].mxu0
        %796 = vmatprep.mubr.f32.mxu0 0.0
        %797 = vmatmul.mubr.f32.gmra.mrb[0].mxu0 %v725
        %v798 = vpop.f32.mrb[0].mxu0
        %v799 = vadd.f32 0.0, %v798
        %v800 = vpop.f32.mrb[0].mxu0
        %801 = vdwg.mxu0
        %802 = vmatprep.subr.mxu0 0.0
        %803 = vmatpush1.msra.mxu0 %v319
        %804 = vmatprep.subr.mxu0 0.0
        %805 = vmatpush1.msra.mxu0 0.0
        %806 = vmatprep.subr.mxu0 0.0
        %807 = vmatpush1.msra.mxu0 0.0
        %808 = vmatprep.subr.mxu0 0.0
        %809 = vmatpush1.msra.mxu0 0.0
        %810 = vmatprep.subr.mxu0 0.0
        %811 = vmatpush1.msra.mxu0 0.0
        %812 = vmatprep.subr.mxu0 0.0
        %813 = vmatpush1.msra.mxu0 0.0
        %814 = vmatprep.subr.mxu0 0.0
        %815 = vmatpush1.msra.mxu0 0.0
        %816 = vmatprep.subr.mxu0 0.0
        %817 = vmatpush1.msra.mxu0 0.0
        %818 = vmatprep.subr.mxu0 0.0
        %819 = vmatpush1.msra.mxu0 0.0
        %820 = vmatprep.subr.mxu0 0.0
        %821 = vmatpush1.msra.mxu0 0.0
        %822 = vmatprep.subr.mxu0 0.0
        %823 = vmatpush1.msra.mxu0 0.0
        %824 = vmatprep.subr.mxu0 0.0
        %825 = vmatpush1.msra.mxu0 0.0
        %826 = vmatprep.subr.mxu0 0.0
        %827 = vmatpush1.msra.mxu0 0.0
        %828 = vmatprep.subr.mxu0 0.0
        %829 = vmatpush1.msra.mxu0 0.0
        %830 = vmatprep.subr.mxu0 0.0
        %831 = vmatpush1.msra.mxu0 0.0
        %832 = vmatprep.subr.mxu0 0.0
        %833 = vmatpush1.msra.mxu0 0.0
        %834 = vmatprep.subr.mxu0 0.0
        %835 = vmatpush1.msra.mxu0 0.0
        %836 = vmatprep.subr.mxu0 0.0
        %837 = vmatpush1.msra.mxu0 0.0
        %838 = vmatprep.subr.mxu0 0.0
        %839 = vmatpush1.msra.mxu0 0.0
        %840 = vmatprep.subr.mxu0 0.0
        %841 = vmatpush1.msra.mxu0 0.0
        %842 = vmatprep.subr.mxu0 0.0
        %843 = vmatpush1.msra.mxu0 0.0
        %844 = vmatprep.subr.mxu0 0.0
        %845 = vmatpush1.msra.mxu0 0.0
        %846 = vmatprep.subr.mxu0 0.0
        %847 = vmatpush1.msra.mxu0 0.0
        %848 = vmatprep.subr.mxu0 0.0
        %849 = vmatpush1.msra.mxu0 0.0
        %850 = vmatprep.subr.mxu0 0.0
        %851 = vmatpush1.msra.mxu0 0.0
        %852 = vmatprep.subr.mxu0 0.0
        %853 = vmatpush1.msra.mxu0 0.0
        %854 = vmatprep.subr.mxu0 0.0
        %855 = vmatpush1.msra.mxu0 0.0
        %856 = vmatprep.subr.mxu0 0.0
        %857 = vmatpush1.msra.mxu0 0.0
        %858 = vmatprep.subr.mxu0 0.0
        %859 = vmatpush1.msra.mxu0 0.0
        %860 = vmatprep.subr.mxu0 0.0
        %861 = vmatpush1.msra.mxu0 0.0
        %862 = vmatprep.subr.mxu0 0.0
        %863 = vmatpush1.msra.mxu0 0.0
        %864 = vmatprep.subr.mxu0 0.0
        %865 = vmatpush1.msra.mxu0 0.0
        %866 = vmatprep.mubr.f32.mxu0 0.0
        %867 = vmatmul.mubr.f32.gmra.mrb[0].mxu0 %v329
        %v868 = vpop.f32.mrb[0].mxu0
        %v869 = vadd.f32 0.0, %v868
        %v870 = vpop.f32.mrb[0].mxu0
        %871 = vmatprep.mubr.f32.mxu0 0.0
        %872 = vmatmul.mubr.f32.gmra.mrb[0].mxu0 %v332
        %v873 = vpop.f32.mrb[0].mxu0
        %v874 = vadd.f32 0.0, %v873
        %v875 = vpop.f32.mrb[0].mxu0
        %876 = vdwg.mxu0
        %v878 = vsel %vm327, %v869, 0
        %v881 = vsel %vm327, %v874, 0
        %883 = vmatprep.subr.mxu0 0.0
        %884 = vmatpush1.msra.mxu0 %v322
        %885 = vmatprep.subr.mxu0 0.0
        %886 = vmatpush1.msra.mxu0 0.0
        %887 = vmatprep.subr.mxu0 0.0
        %888 = vmatpush1.msra.mxu0 0.0
        %889 = vmatprep.subr.mxu0 0.0
        %890 = vmatpush1.msra.mxu0 0.0
        %891 = vmatprep.subr.mxu0 0.0
        %892 = vmatpush1.msra.mxu0 0.0
        %893 = vmatprep.subr.mxu0 0.0
        %894 = vmatpush1.msra.mxu0 0.0
        %895 = vmatprep.subr.mxu0 0.0
        %896 = vmatpush1.msra.mxu0 0.0
        %897 = vmatprep.subr.mxu0 0.0
        %898 = vmatpush1.msra.mxu0 0.0
        %899 = vmatprep.subr.mxu0 0.0
        %900 = vmatpush1.msra.mxu0 0.0
        %901 = vmatprep.subr.mxu0 0.0
        %902 = vmatpush1.msra.mxu0 0.0
        %903 = vmatprep.subr.mxu0 0.0
        %904 = vmatpush1.msra.mxu0 0.0
        %905 = vmatprep.subr.mxu0 0.0
        %906 = vmatpush1.msra.mxu0 0.0
        %907 = vmatprep.subr.mxu0 0.0
        %908 = vmatpush1.msra.mxu0 0.0
        %909 = vmatprep.subr.mxu0 0.0
        %910 = vmatpush1.msra.mxu0 0.0
        %911 = vmatprep.subr.mxu0 0.0
        %912 = vmatpush1.msra.mxu0 0.0
        %913 = vmatprep.subr.mxu0 0.0
        %914 = vmatpush1.msra.mxu0 0.0
        %915 = vmatprep.subr.mxu0 0.0
        %916 = vmatpush1.msra.mxu0 0.0
        %917 = vmatprep.subr.mxu0 0.0
        %918 = vmatpush1.msra.mxu0 0.0
        %919 = vmatprep.subr.mxu0 0.0
        %920 = vmatpush1.msra.mxu0 0.0
        %921 = vmatprep.subr.mxu0 0.0
        %922 = vmatpush1.msra.mxu0 0.0
        %923 = vmatprep.subr.mxu0 0.0
        %924 = vmatpush1.msra.mxu0 0.0
        %925 = vmatprep.subr.mxu0 0.0
        %926 = vmatpush1.msra.mxu0 0.0
        %927 = vmatprep.subr.mxu0 0.0
        %928 = vmatpush1.msra.mxu0 0.0
        %929 = vmatprep.subr.mxu0 0.0
        %930 = vmatpush1.msra.mxu0 0.0
        %931 = vmatprep.subr.mxu0 0.0
        %932 = vmatpush1.msra.mxu0 0.0
        %933 = vmatprep.subr.mxu0 0.0
        %934 = vmatpush1.msra.mxu0 0.0
        %935 = vmatprep.subr.mxu0 0.0
        %936 = vmatpush1.msra.mxu0 0.0
        %937 = vmatprep.subr.mxu0 0.0
        %938 = vmatpush1.msra.mxu0 0.0
        %939 = vmatprep.subr.mxu0 0.0
        %940 = vmatpush1.msra.mxu0 0.0
        %941 = vmatprep.subr.mxu0 0.0
        %942 = vmatpush1.msra.mxu0 0.0
        %943 = vmatprep.subr.mxu0 0.0
        %944 = vmatpush1.msra.mxu0 0.0
        %945 = vmatprep.subr.mxu0 0.0
        %946 = vmatpush1.msra.mxu0 0.0
        %947 = vmatprep.mubr.f32.mxu0 0.0
        %948 = vmatmul.mubr.f32.gmra.mrb[0].mxu0 %v878
        %v949 = vpop.f32.mrb[0].mxu0
        %v950 = vadd.f32 0.0, %v949
        %v951 = vpop.f32.mrb[0].mxu0
        %952 = vmatprep.mubr.f32.mxu0 0.0
        %953 = vmatmul.mubr.f32.gmra.mrb[0].mxu0 %v881
        %v954 = vpop.f32.mrb[0].mxu0
        %v955 = vadd.f32 0.0, %v954
        %v956 = vpop.f32.mrb[0].mxu0
        %957 = vdwg.mxu0
        %v958 = vmax.f32 %v482, %v638
        %v959 = vmax.f32 %v487, %v643
        %v960 = vmax.f32 %v958, %v794
        %v961 = vmax.f32 %v959, %v799
        %v962 = vmax.f32 %v960, %v950
        %v963 = vmax.f32 %v961, %v955
        %v964 = vsub.f32 %v482, %v962
        %v965 = vsub.f32 %v487, %v963
        %v966 = vmul.f32 %v964, 1.442695
        %v967 = vpow.pop %v966
        %v968 = vmul.f32 %v965, 1.442695
        %v969 = vpow.pop %v968
        %v970 = vsub.f32 %v638, %v962
        %v971 = vsub.f32 %v643, %v963
        %v972 = vmul.f32 %v970, 1.442695
        %v973 = vpow.pop %v972
        %v974 = vmul.f32 %v971, 1.442695
        %v975 = vpow.pop %v974
        %v976 = vsub.f32 %v794, %v962
        %v977 = vsub.f32 %v799, %v963
        %v978 = vmul.f32 %v976, 1.442695
        %v979 = vpow.pop %v978
        %v980 = vmul.f32 %v977, 1.442695
        %v981 = vpow.pop %v980
        %v982 = vsub.f32 %v950, %v962
        %v983 = vsub.f32 %v955, %v963
        %v984 = vmul.f32 %v982, 1.442695
        %v985 = vpow.pop %v984
        %v986 = vmul.f32 %v983, 1.442695
        %v987 = vpow.pop %v986
        %v988 = vadd.f32 %v967, %v973
        %v989 = vadd.f32 %v969, %v975
        %v990 = vadd.f32 %v988, %v979
        %v991 = vadd.f32 %v989, %v981
        %v992 = vadd.f32 %v990, %v985
        %v993 = vadd.f32 %v991, %v987
        %v994 = vrcp.pop %v992
        %v995 = vmul.f32 1.0, %v994
        %v996 = vrcp.pop %v993
        %v997 = vmul.f32 1.0, %v996
        %v998 = vlog2.pop %v992
        %v999 = vmul.f32 %v998, 0.6931472
        %v1000 = vlog2.pop %v993
        %v1001 = vmul.f32 %v1000, 0.6931472
        %vm1002 = vcmp.eq.s32.totalorder %v323, 0
        %vm1003 = vcmp.eq.s32.totalorder %v324, 0
        %v1004 = vsel %vm1002, 1, 0
        %v1005 = vsel %vm1003, 1, 0
        %v1006 = vcvt.s32.f32 %v1004
        %v1007 = vcvt.s32.f32 %v1005
        %v1008 = vmul.f32 %v967, %v995
        %v1009 = vmul.f32 %v969, %v997
        %v1010 = vsub.f32 %v1006, %v1008
        %v1011 = vsub.f32 %v1007, %v1009
        %v1012 = vand.u32 2147483647, %v1010
        %v1013 = vand.u32 2147483647, %v1011
        %v1014 = vsel %vm325, %v1012, -1.0
        %v1015 = vsel %vm326, %v1013, -1.0
        %vm1016 = vcmask 130048
        %1017 = vst.msk [vmem:[%s272] sm:$0xff] %vm1016, %v1014
        %1018 = vst.msk [vmem:[%s272 + $0x8] sm:$0xff] %vm1016, %v1015
        %v1019 = vsel %vm1002, %v482, 0.0
        %v1020 = vsel %vm1003, %v487, 0.0
        %v1021 = vadd.f32 %v1019, 0.0
        %v1022 = vadd.f32 %v1020, 0.0
        %vm1023 = vcmp.eq.s32.totalorder %v323, 1
        %vm1024 = vcmp.eq.s32.totalorder %v324, 1
        %v1025 = vsel %vm1023, 1, 0
        %v1026 = vsel %vm1024, 1, 0
        %v1027 = vcvt.s32.f32 %v1025
        %v1028 = vcvt.s32.f32 %v1026
        %v1029 = vmul.f32 %v973, %v995
        %v1030 = vmul.f32 %v975, %v997
        %v1031 = vsub.f32 %v1027, %v1029
        %v1032 = vsub.f32 %v1028, %v1030
        %v1033 = vand.u32 2147483647, %v1031
        %v1034 = vand.u32 2147483647, %v1032
        %v1035 = vsel %vm325, %v1033, -1.0
        %v1036 = vsel %vm326, %v1034, -1.0
        %s1037 = scalar_lea.vmem %s272, 16 [#allocation2]
        %1038 = vst.msk [vmem:[%s1037] sm:$0xff] %vm1016, %v1035
        %1039 = vst.msk [vmem:[%s1037 + $0x8] sm:$0xff] %vm1016, %v1036
        %v1040 = vsel %vm1023, %v638, 0.0
        %v1041 = vsel %vm1024, %v643, 0.0
        %v1042 = vadd.f32 %v1021, %v1040
        %v1043 = vadd.f32 %v1022, %v1041
        %vm1044 = vcmp.eq.s32.totalorder %v323, 2
        %vm1045 = vcmp.eq.s32.totalorder %v324, 2
        %v1046 = vsel %vm1044, 1, 0
        %v1047 = vsel %vm1045, 1, 0
        %v1048 = vcvt.s32.f32 %v1046
        %v1049 = vcvt.s32.f32 %v1047
        %v1050 = vmul.f32 %v979, %v995
        %v1051 = vmul.f32 %v981, %v997
        %v1052 = vsub.f32 %v1048, %v1050
        %v1053 = vsub.f32 %v1049, %v1051
        %v1054 = vand.u32 2147483647, %v1052
        %v1055 = vand.u32 2147483647, %v1053
        %v1056 = vsel %vm325, %v1054, -1.0
        %v1057 = vsel %vm326, %v1055, -1.0
        %s1058 = scalar_lea.vmem %s272, 32 [#allocation2]
        %1059 = vst.msk [vmem:[%s1058] sm:$0xff] %vm1016, %v1056
        %1060 = vst.msk [vmem:[%s1058 + $0x8] sm:$0xff] %vm1016, %v1057
        %v1061 = vsel %vm1044, %v794, 0.0
        %v1062 = vsel %vm1045, %v799, 0.0
        %v1063 = vadd.f32 %v1042, %v1061
        %v1064 = vadd.f32 %v1043, %v1062
        %vm1065 = vcmp.eq.s32.totalorder %v323, 3
        %vm1066 = vcmp.eq.s32.totalorder %v324, 3
        %v1067 = vsel %vm1065, 1, 0
        %v1068 = vsel %vm1066, 1, 0
        %v1069 = vcvt.s32.f32 %v1067
        %v1070 = vcvt.s32.f32 %v1068
        %v1071 = vmul.f32 %v985, %v995
        %v1072 = vmul.f32 %v987, %v997
        %v1073 = vsub.f32 %v1069, %v1071
        %v1074 = vsub.f32 %v1070, %v1072
        %v1075 = vand.u32 2147483647, %v1073
        %v1076 = vand.u32 2147483647, %v1074
        %v1077 = vsel %vm325, %v1075, -1.0
        %v1078 = vsel %vm326, %v1076, -1.0
        %s1079 = scalar_lea.vmem %s272, 48 [#allocation2]
        %1080 = vst.msk [vmem:[%s1079] sm:$0xff] %vm1016, %v1077
        %1081 = vst.msk [vmem:[%s1079 + $0x8] sm:$0xff] %vm1016, %v1078
        %v1082 = vsel %vm1065, %v950, 0.0
        %v1083 = vsel %vm1066, %v955, 0.0
        %v1084 = vadd.f32 %v1063, %v1082
        %v1085 = vadd.f32 %v1064, %v1083
        %v1086 = vadd.f32 %v999, %v962
        %v1087 = vadd.f32 %v1001, %v963
        %v1088 = vsub.f32 %v1086, %v1084
        %v1089 = vsub.f32 %v1087, %v1085
        %v1090 = vsel %vm325, %v1088, 0.0
        %v1091 = vsel %vm326, %v1089, 0.0
        %1092 = vst.msk [vmem:[%s314] sm:$0xff] %vm1016, %v1090
        %1093 = vst.msk [vmem:[%s314 + $0x8] sm:$0xff] %vm1016, %v1091
        %s1094 = sand.u32 %s140, 1
        %s1095 = sand.u32 %s140, 1
        %s1096 = smul.addr %s1095, 64
        %s1097 = scalar_lea.vmem [#allocation2], %s1096
        %s1098 = smul.u32 2, %s22
        %p1099 = scmp.lt.s32.totalorder %s21, 1
        %s1100 = scalar_select %p1099, %s21, 1
        %p1101 = scmp.lt.s32.totalorder %s1098, 1
        %s1102 = scalar_select %p1101, %s1098, 1
        %s1103 = smul.addr %s1100, 2
        %s1104 = sadd.s32 %s1102, %s1103
        %s1105 = smul.addr %s1104, 8
        %s1106 = scalar_lea.vmem %s5, %s1105
        // Predicated region
        $region37: #{criterion_par_forward.1} parent=35 // pred_check
          %p1107 = pneg %p150
        $region38: #{criterion_par_forward.1} parent=35 // pred_check_branch
          %1109 = sbr.rel (%p1107) target = $region40
        $region39: #{criterion_par_forward.1} parent=35 // pred_region
          %s1110 = smul.u32 2, %s22
          %s1111 = smul.addr %s21, 2
          %s1112 = sadd.s32 %s1110, %s1111
          %s1113 = smul.addr %s1112, 8
          %s1114 = scalar_lea.vmem %s4, %s1113
          // Predicated region
          $region41: #{criterion_par_forward.1} parent=39 // pred_check
            _
          $region42: #{criterion_par_forward.1} parent=39 // pred_check_branch
            %1116 = sbr.rel (0) target = $region44
          $region43: #{criterion_par_forward.1} parent=39 // pred_region
            // Predicated region
            $region45: #{criterion_par_forward.1} parent=43 // pred_check
              _
            $region46: #{criterion_par_forward.1} parent=43 // pred_check_branch
              %1118 = sbr.rel (0) target = $region48
            $region47: #{criterion_par_forward.1} parent=43 // pred_region
              // Predicated region
              $region60: #{criterion_par_forward.1} parent=47 // pred_check
                _
              $region61: #{criterion_par_forward.1} parent=47 // pred_check_branch
                %1147 = sbr.rel (0) target = $region63
              $region62: #{criterion_par_forward.1} parent=47 // pred_region
                loop: start=0, step=1, limit=1
                $region64: #{criterion_par_forward.1} parent=62 // loop_pre_header
                  _
                $region65: #{criterion_par_forward.1} parent=62 // loop_header
                  %s1149 = sphi 0, %s1153
                  %p1150 = scmp.ge.s32.totalorder %s1149, 1
                  %s1154 = sphi %s1097, %s1097
                  %s1155 = sphi %s1114, %s1114
                $region66: #{criterion_par_forward.1} parent=62 // loop_header_branch
                  %1152 = sbr.rel (%p1150) target = $region70
                $region67: #{criterion_par_forward.1} parent=62 // loop_body
                  %v1156 = vld [vmem:[%s1154] sm:$0xff]
                  %1157 = vst [vmem:[%s1155] sm:$0xff] %v1156
                  %v1158 = vld [vmem:[%s1154 + $0x8] sm:$0xff]
                  %1159 = vst [vmem:[%s1155 + $0x8] sm:$0xff] %v1158
                  %v1160 = vld [vmem:[%s1154 + $0x10] sm:$0xff]
                  %1161 = vst [vmem:[%s1155 + $0x20] sm:$0xff] %v1160
                  %v1162 = vld [vmem:[%s1154 + $0x18] sm:$0xff]
                  %1163 = vst [vmem:[%s1155 + $0x28] sm:$0xff] %v1162
                  %v1164 = vld [vmem:[%s1154 + $0x20] sm:$0xff]
                  %1165 = vst [vmem:[%s1155 + $0x40] sm:$0xff] %v1164
                  %v1166 = vld [vmem:[%s1154 + $0x28] sm:$0xff]
                  %1167 = vst [vmem:[%s1155 + $0x48] sm:$0xff] %v1166
                  %v1168 = vld [vmem:[%s1154 + $0x30] sm:$0xff]
                  %1169 = vst [vmem:[%s1155 + $0x60] sm:$0xff] %v1168
                  %v1170 = vld [vmem:[%s1154 + $0x38] sm:$0xff]
                  %1171 = vst [vmem:[%s1155 + $0x68] sm:$0xff] %v1170
                $region68: #{criterion_par_forward.1} parent=62 // loop_footer
                  %s1153 = sadd.s32 1, %s1149
                $region69: #{criterion_par_forward.1} parent=62 // loop_footer_branch
                  %1148 = sbr.rel target = $region65
                $region70: #{criterion_par_forward.1} parent=62 // loop_exit
                  _
              $region63: #{criterion_par_forward.1} parent=47 // pred_fallthru
                _
              // Predicated region
              $region71: #{criterion_par_forward.1} parent=47 // pred_check
                _
              $region72: #{criterion_par_forward.1} parent=47 // pred_check_branch
                %1173 = sbr.rel target = $region74
              $region73: #{criterion_par_forward.1} parent=47 // pred_region
                _
              $region74: #{criterion_par_forward.1} parent=47 // pred_fallthru
                _
            $region48: #{criterion_par_forward.1} parent=43 // pred_fallthru
              _
            // Predicated region
            $region49: #{criterion_par_forward.1} parent=43 // pred_check
              _
            $region50: #{criterion_par_forward.1} parent=43 // pred_check_branch
              %1120 = sbr.rel target = $region52
            $region51: #{criterion_par_forward.1} parent=43 // pred_region
              loop: start=0, step=1, limit=1
              $region53: #{criterion_par_forward.1} parent=51 // loop_pre_header
                _
              $region54: #{criterion_par_forward.1} parent=51 // loop_header
                %s1123 = sphi 0, %s1127
                %p1124 = scmp.ge.s32.totalorder %s1123, 1
                %s1128 = sphi %s1097, %s1097
                %s1129 = sphi %s1114, %s1114
              $region55: #{criterion_par_forward.1} parent=51 // loop_header_branch
                %1126 = sbr.rel (%p1124) target = $region59
              $region56: #{criterion_par_forward.1} parent=51 // loop_body
                %v1130 = vld [vmem:[%s1128] sm:$0xff]
                %1131 = vst [vmem:[%s1129] sm:$0xff] %v1130
                %v1132 = vld [vmem:[%s1128 + $0x8] sm:$0xff]
                %1133 = vst [vmem:[%s1129 + $0x8] sm:$0xff] %v1132
                %v1134 = vld [vmem:[%s1128 + $0x10] sm:$0xff]
                %1135 = vst [vmem:[%s1129 + $0x20] sm:$0xff] %v1134
                %v1136 = vld [vmem:[%s1128 + $0x18] sm:$0xff]
                %1137 = vst [vmem:[%s1129 + $0x28] sm:$0xff] %v1136
                %v1138 = vld [vmem:[%s1128 + $0x20] sm:$0xff]
                %1139 = vst [vmem:[%s1129 + $0x40] sm:$0xff] %v1138
                %v1140 = vld [vmem:[%s1128 + $0x28] sm:$0xff]
                %1141 = vst [vmem:[%s1129 + $0x48] sm:$0xff] %v1140
                %v1142 = vld [vmem:[%s1128 + $0x30] sm:$0xff]
                %1143 = vst [vmem:[%s1129 + $0x60] sm:$0xff] %v1142
                %v1144 = vld [vmem:[%s1128 + $0x38] sm:$0xff]
                %1145 = vst [vmem:[%s1129 + $0x68] sm:$0xff] %v1144
              $region57: #{criterion_par_forward.1} parent=51 // loop_footer
                %s1127 = sadd.s32 1, %s1123
              $region58: #{criterion_par_forward.1} parent=51 // loop_footer_branch
                %1122 = sbr.rel target = $region54
              $region59: #{criterion_par_forward.1} parent=51 // loop_exit
                _
            $region52: #{criterion_par_forward.1} parent=43 // pred_fallthru
              _
          $region44: #{criterion_par_forward.1} parent=39 // pred_fallthru
            _
          %1174 = vnop
        $region40: #{criterion_par_forward.1} parent=35 // pred_fallthru
          _
        // Predicated region
        $region75: #{criterion_par_forward.1} parent=35 // pred_check
          %p1175 = pneg %p178
        $region76: #{criterion_par_forward.1} parent=35 // pred_check_branch
          %1177 = sbr.rel (%p1175) target = $region78
        $region77: #{criterion_par_forward.1} parent=35 // pred_region
          %s1178 = smul.u32 2, %s22
        $region78: #{criterion_par_forward.1} parent=35 // pred_fallthru
          _
      $region36: #{criterion_par_forward.1} parent=5 // pred_fallthru
        _
      %p1179 = scmp.le.s32.totalorder 2, %s12
      // Predicated region
      $region79: #{criterion_par_forward.1} parent=5 // pred_check
        %p1180 = pneg %p1179
      $region80: #{criterion_par_forward.1} parent=5 // pred_check_branch
        %1182 = sbr.rel (%p1180) target = $region82
      $region81: #{criterion_par_forward.1} parent=5 // pred_region
        %s1183 = ssub.s32 %s12, 2
        // Predicated region
        $region83: #{criterion_par_forward.1} parent=81 // pred_check
          %p1184 = pneg %p156
        $region84: #{criterion_par_forward.1} parent=81 // pred_check_branch
          %1186 = sbr.rel (%p1184) target = $region86
        $region85: #{criterion_par_forward.1} parent=81 // pred_region
          %s1187 = sand.u32 %s141, 1
          %s1188 = sand.u32 %s141, 1
          %s1189 = smul.addr %s1188, 64
          %s1190 = scalar_lea.vmem [#allocation2], %s1189
        $region86: #{criterion_par_forward.1} parent=81 // pred_fallthru
          _
        // Predicated region
        $region87: #{criterion_par_forward.1} parent=81 // pred_check
          %p1191 = pneg %p184
        $region88: #{criterion_par_forward.1} parent=81 // pred_check_branch
          %1193 = sbr.rel (%p1191) target = $region90
        $region89: #{criterion_par_forward.1} parent=81 // pred_region
          %s1194 = smul.u32 2, %s24
          %p1195 = scmp.lt.s32.totalorder %s23, 1
          %s1196 = scalar_select %p1195, %s23, 1
          %p1197 = scmp.lt.s32.totalorder %s1194, 1
          %s1198 = scalar_select %p1197, %s1194, 1
          %s1199 = smul.addr %s1196, 2
          %s1200 = sadd.s32 %s1198, %s1199
          %s1201 = smul.addr %s1200, 8
          %s1202 = scalar_lea.vmem %s5, %s1201
        $region90: #{criterion_par_forward.1} parent=81 // pred_fallthru
          _
      $region82: #{criterion_par_forward.1} parent=5 // pred_fallthru
        _
    $region6: #{criterion_par_forward.1} parent=1 // loop_footer
      %s16 = sadd.s32 1, %s12
    $region7: #{criterion_par_forward.1} parent=1 // loop_footer_branch
      %11 = sbr.rel target = $region3
    $region8: #{criterion_par_forward.1} parent=1 // loop_exit
      _

</llo_original>
